<compile_context>
chip_gen: v5e
topology: v5e:2x2
jax: 0.10.0
libtpu: 0.0.40
codegen_flags: <defaults>
</compile_context>

<pallas_src>
import functools

import jax
import jax.numpy as jnp
from jax import lax
from jax.experimental import pallas as pl
from jax.experimental.pallas import tpu as pltpu


def _ppeg_kernel(x_ref, w_ref, b_ref, o_ref, xpad_ref, *, compute_dtype):
    """One (batch element, channel tile) per grid step.

    x_ref   : (1, H, W, TC)   un-padded NHWC feature tile (channels lane-dense)
    w_ref   : (49, TC)        folded effective 7x7 depthwise weights (row t = dy*7+dx)
    b_ref   : (1, TC)         combined bias (b7 + b5 + b3)
    o_ref   : (1, H, W, TC)
    xpad_ref: (H+6, W+6, TC)  VMEM scratch for the zero-padded slab (compute_dtype)
    """
    H = x_ref.shape[1]
    W = x_ref.shape[2]
    TC = x_ref.shape[3]

    # Zero only the 3-wide halo border (interior is fully overwritten below).
    # Kept per-step so it remains correct when the grid is split across cores.
    xpad_ref[0:3, :, :] = jnp.zeros((3, W + 6, TC), compute_dtype)
    xpad_ref[3 + H:6 + H, :, :] = jnp.zeros((3, W + 6, TC), compute_dtype)
    xpad_ref[3:3 + H, 0:3, :] = jnp.zeros((H, 3, TC), compute_dtype)
    xpad_ref[3:3 + H, 3 + W:6 + W, :] = jnp.zeros((H, 3, TC), compute_dtype)
    xpad_ref[3:3 + H, 3:3 + W, :] = x_ref[0].astype(compute_dtype)

    # Hoist the 49 weight-row extractions out of the tap loop (no per-tap
    # 3-D value indexing / relayout).
    w_rows = [w_ref[t, :].astype(compute_dtype) for t in range(49)]

    # Single folded 7x7 tap loop.  The padded slab is sliced through the REF
    # (plain offset vector loads that co-issue with the VALU work) instead of
    # being materialized as one value.  Two independent accumulators.
    acc0 = None
    acc1 = None
    for dy in range(7):
        for dx in range(7):
            t = dy * 7 + dx
            term = xpad_ref[dy:dy + H, dx:dx + W, :] * w_rows[t]
            if t % 2 == 0:
                acc0 = term if acc0 is None else acc0 + term
            else:
                acc1 = term if acc1 is None else acc1 + term

    acc = (acc0 + acc1).astype(jnp.float32) + b_ref[...].astype(jnp.float32)
    o_ref[0] = acc.astype(o_ref.dtype)


def _pick_channel_tile(H, W, Cp, in_itemsize, out_itemsize, compute_itemsize,
                       budget_bytes=40 * 1024 * 1024):
    """Largest multiple-of-128 tile dividing Cp whose per-step working set fits."""
    best = 128
    tc = 128
    while tc <= Cp:
        if Cp % tc == 0:
            est = ((H + 6) * (W + 6) * tc * compute_itemsize   # padded scratch
                   + 2 * H * W * tc * in_itemsize              # double-buffered in
                   + 2 * H * W * tc * out_itemsize             # double-buffered out
                   + 2 * H * W * tc * compute_itemsize)        # 2 accumulators
            if est <= budget_bytes:
                best = tc
        tc += 128
    return best


@functools.partial(jax.jit, static_argnames=("H", "W", "channel_tile", "use_bf16_taps"))
def ppeg_forward(x, params, H, W, *, channel_tile=None, use_bf16_taps=False):
    """x: (B, 1 + H*W, C) float32. Returns same shape.

    use_bf16_taps: run the 49 tap multiplies/adds in bf16 (bias/output stay f32).
      ~2x VPU throughput on v6e/v7x where this kernel is VALU-bound; needs a
      looser test tolerance; keep False on v5e (no bf16 VPU).
    """
    B, N, C = x.shape
    assert N == 1 + H * W

    cls_token = x[:, :1, :]                      # (B, 1, C)
    feat = x[:, 1:, :].reshape(B, H, W, C)       # NHWC; no spatial padding in HBM

    w7, b7, w5, b5, w3, b3 = (params["w7"], params["b7"], params["w5"],
                              params["b5"], params["w3"], params["b3"])

    # Fold the three depthwise kernels + identity into one effective 7x7 kernel.
    w_eff = w7.astype(jnp.float32)
    w_eff = w_eff.at[1:6, 1:6, :].add(w5.astype(jnp.float32))   # 5x5 -> +1 offset
    w_eff = w_eff.at[2:5, 2:5, :].add(w3.astype(jnp.float32))   # 3x3 -> +2 offset
    w_eff = w_eff.at[3, 3, :].add(1.0)                          # identity term
    bias = (b7 + b5 + b3).reshape(1, C).astype(jnp.float32)

    # Lane-dense channels: pad C up to a multiple of 128 (no-op for C = 384/512).
    Cp = ((C + 127) // 128) * 128
    if Cp != C:
        pad_c = Cp - C
        feat = jnp.pad(feat, ((0, 0), (0, 0), (0, 0), (0, pad_c)))
        w_eff = jnp.pad(w_eff, ((0, 0), (0, 0), (0, pad_c)))
        bias = jnp.pad(bias, ((0, 0), (0, pad_c)))
    w_eff = w_eff.reshape(49, Cp)                # flattened taps: row t = dy*7+dx

    compute_dtype = jnp.bfloat16 if use_bf16_taps else jnp.float32
    if channel_tile is None:
        TC = _pick_channel_tile(H, W, Cp, feat.dtype.itemsize, x.dtype.itemsize,
                                jnp.dtype(compute_dtype).itemsize)
    else:
        TC = channel_tile
    assert TC % 128 == 0 and Cp % TC == 0

    kernel = functools.partial(_ppeg_kernel, compute_dtype=compute_dtype)
    out = pl.pallas_call(
        kernel,
        out_shape=jax.ShapeDtypeStruct((B, H, W, Cp), x.dtype),
        grid_spec=pltpu.PrefetchScalarGridSpec(
            num_scalar_prefetch=0,
            grid=(B, Cp // TC),
            in_specs=[
                pl.BlockSpec((1, H, W, TC), lambda b, c: (b, 0, 0, c)),
                pl.BlockSpec((49, TC), lambda b, c: (0, c)),
                pl.BlockSpec((1, TC), lambda b, c: (0, c)),
            ],
            out_specs=pl.BlockSpec((1, H, W, TC), lambda b, c: (b, 0, 0, c)),
            scratch_shapes=[pltpu.VMEM((H + 6, W + 6, TC), compute_dtype)],
        ),
        compiler_params=pltpu.CompilerParams(
            dimension_semantics=("parallel", "parallel"),
            vmem_limit_bytes=48 * 1024 * 1024,   # headroom on v7x; raise on v5e/v6e
        ),
    )(feat, w_eff, bias)

    if Cp != C:                                  # no extra slice pass when C % 128 == 0
        out = out[..., :C]
    out = out.reshape(B, H * W, C)
    return jnp.concatenate([cls_token, out], axis=1)


def _reference_forward(x, params, H, W):
    """Pure-JAX reference mirroring the PyTorch module (NCHW depthwise convs)."""
    B, N, C = x.shape
    cls_token = x[:, :1, :]
    feat = jnp.transpose(x[:, 1:, :], (0, 2, 1)).reshape(B, C, H, W)  # NCHW

    def dwconv(f, w_hwc, b, k):
        w = jnp.transpose(w_hwc, (2, 0, 1))[:, None, :, :]            # (C,1,k,k)
        pad = k // 2
        y = lax.conv_general_dilated(
            f, w, window_strides=(1, 1), padding=((pad, pad), (pad, pad)),
            feature_group_count=C,
            dimension_numbers=("NCHW", "OIHW", "NCHW"))
        return y + b[None, :, None, None]

    y = (dwconv(feat, params["w7"], params["b7"], 7) + feat
         + dwconv(feat, params["w5"], params["b5"], 5)
         + dwconv(feat, params["w3"], params["b3"], 3))
    y = y.reshape(B, C, H * W).transpose(0, 2, 1)
    return jnp.concatenate([cls_token, y], axis=1)


def init_params(key, C):
    ks = jax.random.split(key, 6)
    scale = 0.1
    return {
        "w7": scale * jax.random.normal(ks[0], (7, 7, C), jnp.float32),
        "b7": scale * jax.random.normal(ks[1], (C,), jnp.float32),
        "w5": scale * jax.random.normal(ks[2], (5, 5, C), jnp.float32),
        "b5": scale * jax.random.normal(ks[3], (C,), jnp.float32),
        "w3": scale * jax.random.normal(ks[4], (3, 3, C), jnp.float32),
        "b3": scale * jax.random.normal(ks[5], (C,), jnp.float32),
    }


if __name__ == "__main__":
    B, C, H, W = 2, 32, 8, 8
    N = 1 + H * W

    key = jax.random.PRNGKey(0)
    kx, kp = jax.random.split(key)
    x = jax.random.normal(kx, (B, N, C), jnp.float32)
    params = init_params(kp, C)

    out = ppeg_forward(x, params, H, W)
    out = jax.block_until_ready(out)

    ref = _reference_forward(x, params, H, W)
    assert out.shape == (B, N, C)
    assert jnp.allclose(out, ref, atol=1e-4, rtol=1e-4), "mismatch vs reference"

    print("KERNEL_OK")
</pallas_src>

<mosaic_0001>
module attributes {stable_mosaic.version = 11 : i64} {
  func.func @_ppeg_kernel(%arg0: i32, %arg1: i32, %arg2: memref<1x8x8x128xf32, #tpu.memory_space<vmem>>, %arg3: memref<49x128xf32, #tpu.memory_space<vmem>>, %arg4: memref<1x128xf32, #tpu.memory_space<vmem>>, %arg5: memref<1x8x8x128xf32, #tpu.memory_space<vmem>>, %arg6: memref<14x14x128xf32, #tpu.memory_space<vmem>>) attributes {dimension_semantics = [#tpu.dimension_semantics<parallel>, #tpu.dimension_semantics<parallel>], iteration_bounds = array<i64: 2, 1>, scalar_prefetch = 0 : i64, scratch_operands = 1 : i64, tpu.core_type = #tpu.core_type<tc>, window_params = [{transform_indices = @transform_0, window_bounds = array<i64: 1, 8, 8, 128>}, {transform_indices = @transform_1, window_bounds = array<i64: 49, 128>}, {transform_indices = @transform_2, window_bounds = array<i64: 1, 128>}, {transform_indices = @transform_3, window_bounds = array<i64: 1, 8, 8, 128>}]} {
    %cst = arith.constant 0.000000e+00 : f32
    %0 = vector.broadcast %cst : f32 to vector<3x14x128xf32>
    %c0 = arith.constant 0 : index
    %c0_0 = arith.constant 0 : index
    %c0_1 = arith.constant 0 : index
    %1 = vector.load %arg6[%c0, %c0_0, %c0_1] : memref<14x14x128xf32, #tpu.memory_space<vmem>>, vector<3x14x128xf32>
    tpu.vector_store %arg6[%c0, %c0_0, %c0_1], %0 {strides = array<i32>} : memref<14x14x128xf32, #tpu.memory_space<vmem>>, vector<3x14x128xf32>,
    %cst_2 = arith.constant 0.000000e+00 : f32
    %2 = vector.broadcast %cst_2 : f32 to vector<3x14x128xf32>
    %c11 = arith.constant 11 : index
    %c0_3 = arith.constant 0 : index
    %c0_4 = arith.constant 0 : index
    %3 = vector.load %arg6[%c11, %c0_3, %c0_4] : memref<14x14x128xf32, #tpu.memory_space<vmem>>, vector<3x14x128xf32>
    tpu.vector_store %arg6[%c11, %c0_3, %c0_4], %2 {strides = array<i32>} : memref<14x14x128xf32, #tpu.memory_space<vmem>>, vector<3x14x128xf32>,
    %cst_5 = arith.constant 0.000000e+00 : f32
    %4 = vector.broadcast %cst_5 : f32 to vector<8x3x128xf32>
    %c3 = arith.constant 3 : index
    %c0_6 = arith.constant 0 : index
    %c0_7 = arith.constant 0 : index
    %5 = vector.load %arg6[%c3, %c0_6, %c0_7] : memref<14x14x128xf32, #tpu.memory_space<vmem>>, vector<8x3x128xf32>
    tpu.vector_store %arg6[%c3, %c0_6, %c0_7], %4 {strides = array<i32>} : memref<14x14x128xf32, #tpu.memory_space<vmem>>, vector<8x3x128xf32>,
    %cst_8 = arith.constant 0.000000e+00 : f32
    %6 = vector.broadcast %cst_8 : f32 to vector<8x3x128xf32>
    %c3_9 = arith.constant 3 : index
    %c11_10 = arith.constant 11 : index
    %c0_11 = arith.constant 0 : index
    %7 = vector.load %arg6[%c3_9, %c11_10, %c0_11] : memref<14x14x128xf32, #tpu.memory_space<vmem>>, vector<8x3x128xf32>
    tpu.vector_store %arg6[%c3_9, %c11_10, %c0_11], %6 {strides = array<i32>} : memref<14x14x128xf32, #tpu.memory_space<vmem>>, vector<8x3x128xf32>,
    %c0_12 = arith.constant 0 : index
    %c0_13 = arith.constant 0 : index
    %c0_14 = arith.constant 0 : index
    %c0_15 = arith.constant 0 : index
    %8 = vector.load %arg2[%c0_12, %c0_13, %c0_14, %c0_15] : memref<1x8x8x128xf32, #tpu.memory_space<vmem>>, vector<1x8x8x128xf32>
    %9 = vector.shape_cast %8 : vector<1x8x8x128xf32> to vector<8x8x128xf32>
    %c3_16 = arith.constant 3 : index
    %c3_17 = arith.constant 3 : index
    %c0_18 = arith.constant 0 : index
    %10 = vector.load %arg6[%c3_16, %c3_17, %c0_18] : memref<14x14x128xf32, #tpu.memory_space<vmem>>, vector<8x8x128xf32>
    tpu.vector_store %arg6[%c3_16, %c3_17, %c0_18], %9 {strides = array<i32>} : memref<14x14x128xf32, #tpu.memory_space<vmem>>, vector<8x8x128xf32>,
    %c0_19 = arith.constant 0 : index
    %c0_20 = arith.constant 0 : index
    %11 = vector.load %arg3[%c0_19, %c0_20] : memref<49x128xf32, #tpu.memory_space<vmem>>, vector<1x128xf32>
    %12 = vector.shape_cast %11 : vector<1x128xf32> to vector<128xf32>
    %c1 = arith.constant 1 : index
    %c0_21 = arith.constant 0 : index
    %13 = vector.load %arg3[%c1, %c0_21] : memref<49x128xf32, #tpu.memory_space<vmem>>, vector<1x128xf32>
    %14 = vector.shape_cast %13 : vector<1x128xf32> to vector<128xf32>
    %c2 = arith.constant 2 : index
    %c0_22 = arith.constant 0 : index
    %15 = vector.load %arg3[%c2, %c0_22] : memref<49x128xf32, #tpu.memory_space<vmem>>, vector<1x128xf32>
    %16 = vector.shape_cast %15 : vector<1x128xf32> to vector<128xf32>
    %c3_23 = arith.constant 3 : index
    %c0_24 = arith.constant 0 : index
    %17 = vector.load %arg3[%c3_23, %c0_24] : memref<49x128xf32, #tpu.memory_space<vmem>>, vector<1x128xf32>
    %18 = vector.shape_cast %17 : vector<1x128xf32> to vector<128xf32>
    %c4 = arith.constant 4 : index
    %c0_25 = arith.constant 0 : index
    %19 = vector.load %arg3[%c4, %c0_25] : memref<49x128xf32, #tpu.memory_space<vmem>>, vector<1x128xf32>
    %20 = vector.shape_cast %19 : vector<1x128xf32> to vector<128xf32>
    %c5 = arith.constant 5 : index
    %c0_26 = arith.constant 0 : index
    %21 = vector.load %arg3[%c5, %c0_26] : memref<49x128xf32, #tpu.memory_space<vmem>>, vector<1x128xf32>
    %22 = vector.shape_cast %21 : vector<1x128xf32> to vector<128xf32>
    %c6 = arith.constant 6 : index
    %c0_27 = arith.constant 0 : index
    %23 = vector.load %arg3[%c6, %c0_27] : memref<49x128xf32, #tpu.memory_space<vmem>>, vector<1x128xf32>
    %24 = vector.shape_cast %23 : vector<1x128xf32> to vector<128xf32>
    %c7 = arith.constant 7 : index
    %c0_28 = arith.constant 0 : index
    %25 = vector.load %arg3[%c7, %c0_28] : memref<49x128xf32, #tpu.memory_space<vmem>>, vector<1x128xf32>
    %26 = vector.shape_cast %25 : vector<1x128xf32> to vector<128xf32>
    %c8 = arith.constant 8 : index
    %c0_29 = arith.constant 0 : index
    %27 = vector.load %arg3[%c8, %c0_29] : memref<49x128xf32, #tpu.memory_space<vmem>>, vector<1x128xf32>
    %28 = vector.shape_cast %27 : vector<1x128xf32> to vector<128xf32>
    %c9 = arith.constant 9 : index
    %c0_30 = arith.constant 0 : index
    %29 = vector.load %arg3[%c9, %c0_30] : memref<49x128xf32, #tpu.memory_space<vmem>>, vector<1x128xf32>
    %30 = vector.shape_cast %29 : vector<1x128xf32> to vector<128xf32>
    %c10 = arith.constant 10 : index
    %c0_31 = arith.constant 0 : index
    %31 = vector.load %arg3[%c10, %c0_31] : memref<49x128xf32, #tpu.memory_space<vmem>>, vector<1x128xf32>
    %32 = vector.shape_cast %31 : vector<1x128xf32> to vector<128xf32>
    %c11_32 = arith.constant 11 : index
    %c0_33 = arith.constant 0 : index
    %33 = vector.load %arg3[%c11_32, %c0_33] : memref<49x128xf32, #tpu.memory_space<vmem>>, vector<1x128xf32>
    %34 = vector.shape_cast %33 : vector<1x128xf32> to vector<128xf32>
    %c12 = arith.constant 12 : index
    %c0_34 = arith.constant 0 : index
    %35 = vector.load %arg3[%c12, %c0_34] : memref<49x128xf32, #tpu.memory_space<vmem>>, vector<1x128xf32>
    %36 = vector.shape_cast %35 : vector<1x128xf32> to vector<128xf32>
    %c13 = arith.constant 13 : index
    %c0_35 = arith.constant 0 : index
    %37 = vector.load %arg3[%c13, %c0_35] : memref<49x128xf32, #tpu.memory_space<vmem>>, vector<1x128xf32>
    %38 = vector.shape_cast %37 : vector<1x128xf32> to vector<128xf32>
    %c14 = arith.constant 14 : index
    %c0_36 = arith.constant 0 : index
    %39 = vector.load %arg3[%c14, %c0_36] : memref<49x128xf32, #tpu.memory_space<vmem>>, vector<1x128xf32>
    %40 = vector.shape_cast %39 : vector<1x128xf32> to vector<128xf32>
    %c15 = arith.constant 15 : index
    %c0_37 = arith.constant 0 : index
    %41 = vector.load %arg3[%c15, %c0_37] : memref<49x128xf32, #tpu.memory_space<vmem>>, vector<1x128xf32>
    %42 = vector.shape_cast %41 : vector<1x128xf32> to vector<128xf32>
    %c16 = arith.constant 16 : index
    %c0_38 = arith.constant 0 : index
    %43 = vector.load %arg3[%c16, %c0_38] : memref<49x128xf32, #tpu.memory_space<vmem>>, vector<1x128xf32>
    %44 = vector.shape_cast %43 : vector<1x128xf32> to vector<128xf32>
    %c17 = arith.constant 17 : index
    %c0_39 = arith.constant 0 : index
    %45 = vector.load %arg3[%c17, %c0_39] : memref<49x128xf32, #tpu.memory_space<vmem>>, vector<1x128xf32>
    %46 = vector.shape_cast %45 : vector<1x128xf32> to vector<128xf32>
    %c18 = arith.constant 18 : index
    %c0_40 = arith.constant 0 : index
    %47 = vector.load %arg3[%c18, %c0_40] : memref<49x128xf32, #tpu.memory_space<vmem>>, vector<1x128xf32>
    %48 = vector.shape_cast %47 : vector<1x128xf32> to vector<128xf32>
    %c19 = arith.constant 19 : index
    %c0_41 = arith.constant 0 : index
    %49 = vector.load %arg3[%c19, %c0_41] : memref<49x128xf32, #tpu.memory_space<vmem>>, vector<1x128xf32>
    %50 = vector.shape_cast %49 : vector<1x128xf32> to vector<128xf32>
    %c20 = arith.constant 20 : index
    %c0_42 = arith.constant 0 : index
    %51 = vector.load %arg3[%c20, %c0_42] : memref<49x128xf32, #tpu.memory_space<vmem>>, vector<1x128xf32>
    %52 = vector.shape_cast %51 : vector<1x128xf32> to vector<128xf32>
    %c21 = arith.constant 21 : index
    %c0_43 = arith.constant 0 : index
    %53 = vector.load %arg3[%c21, %c0_43] : memref<49x128xf32, #tpu.memory_space<vmem>>, vector<1x128xf32>
    %54 = vector.shape_cast %53 : vector<1x128xf32> to vector<128xf32>
    %c22 = arith.constant 22 : index
    %c0_44 = arith.constant 0 : index
    %55 = vector.load %arg3[%c22, %c0_44] : memref<49x128xf32, #tpu.memory_space<vmem>>, vector<1x128xf32>
    %56 = vector.shape_cast %55 : vector<1x128xf32> to vector<128xf32>
    %c23 = arith.constant 23 : index
    %c0_45 = arith.constant 0 : index
    %57 = vector.load %arg3[%c23, %c0_45] : memref<49x128xf32, #tpu.memory_space<vmem>>, vector<1x128xf32>
    %58 = vector.shape_cast %57 : vector<1x128xf32> to vector<128xf32>
    %c24 = arith.constant 24 : index
    %c0_46 = arith.constant 0 : index
    %59 = vector.load %arg3[%c24, %c0_46] : memref<49x128xf32, #tpu.memory_space<vmem>>, vector<1x128xf32>
    %60 = vector.shape_cast %59 : vector<1x128xf32> to vector<128xf32>
    %c25 = arith.constant 25 : index
    %c0_47 = arith.constant 0 : index
    %61 = vector.load %arg3[%c25, %c0_47] : memref<49x128xf32, #tpu.memory_space<vmem>>, vector<1x128xf32>
    %62 = vector.shape_cast %61 : vector<1x128xf32> to vector<128xf32>
    %c26 = arith.constant 26 : index
    %c0_48 = arith.constant 0 : index
    %63 = vector.load %arg3[%c26, %c0_48] : memref<49x128xf32, #tpu.memory_space<vmem>>, vector<1x128xf32>
    %64 = vector.shape_cast %63 : vector<1x128xf32> to vector<128xf32>
    %c27 = arith.constant 27 : index
    %c0_49 = arith.constant 0 : index
    %65 = vector.load %arg3[%c27, %c0_49] : memref<49x128xf32, #tpu.memory_space<vmem>>, vector<1x128xf32>
    %66 = vector.shape_cast %65 : vector<1x128xf32> to vector<128xf32>
    %c28 = arith.constant 28 : index
    %c0_50 = arith.constant 0 : index
    %67 = vector.load %arg3[%c28, %c0_50] : memref<49x128xf32, #tpu.memory_space<vmem>>, vector<1x128xf32>
    %68 = vector.shape_cast %67 : vector<1x128xf32> to vector<128xf32>
    %c29 = arith.constant 29 : index
    %c0_51 = arith.constant 0 : index
    %69 = vector.load %arg3[%c29, %c0_51] : memref<49x128xf32, #tpu.memory_space<vmem>>, vector<1x128xf32>
    %70 = vector.shape_cast %69 : vector<1x128xf32> to vector<128xf32>
    %c30 = arith.constant 30 : index
    %c0_52 = arith.constant 0 : index
    %71 = vector.load %arg3[%c30, %c0_52] : memref<49x128xf32, #tpu.memory_space<vmem>>, vector<1x128xf32>
    %72 = vector.shape_cast %71 : vector<1x128xf32> to vector<128xf32>
    %c31 = arith.constant 31 : index
    %c0_53 = arith.constant 0 : index
    %73 = vector.load %arg3[%c31, %c0_53] : memref<49x128xf32, #tpu.memory_space<vmem>>, vector<1x128xf32>
    %74 = vector.shape_cast %73 : vector<1x128xf32> to vector<128xf32>
    %c32 = arith.constant 32 : index
    %c0_54 = arith.constant 0 : index
    %75 = vector.load %arg3[%c32, %c0_54] : memref<49x128xf32, #tpu.memory_space<vmem>>, vector<1x128xf32>
    %76 = vector.shape_cast %75 : vector<1x128xf32> to vector<128xf32>
    %c33 = arith.constant 33 : index
    %c0_55 = arith.constant 0 : index
    %77 = vector.load %arg3[%c33, %c0_55] : memref<49x128xf32, #tpu.memory_space<vmem>>, vector<1x128xf32>
    %78 = vector.shape_cast %77 : vector<1x128xf32> to vector<128xf32>
    %c34 = arith.constant 34 : index
    %c0_56 = arith.constant 0 : index
    %79 = vector.load %arg3[%c34, %c0_56] : memref<49x128xf32, #tpu.memory_space<vmem>>, vector<1x128xf32>
    %80 = vector.shape_cast %79 : vector<1x128xf32> to vector<128xf32>
    %c35 = arith.constant 35 : index
    %c0_57 = arith.constant 0 : index
    %81 = vector.load %arg3[%c35, %c0_57] : memref<49x128xf32, #tpu.memory_space<vmem>>, vector<1x128xf32>
    %82 = vector.shape_cast %81 : vector<1x128xf32> to vector<128xf32>
    %c36 = arith.constant 36 : index
    %c0_58 = arith.constant 0 : index
    %83 = vector.load %arg3[%c36, %c0_58] : memref<49x128xf32, #tpu.memory_space<vmem>>, vector<1x128xf32>
    %84 = vector.shape_cast %83 : vector<1x128xf32> to vector<128xf32>
    %c37 = arith.constant 37 : index
    %c0_59 = arith.constant 0 : index
    %85 = vector.load %arg3[%c37, %c0_59] : memref<49x128xf32, #tpu.memory_space<vmem>>, vector<1x128xf32>
    %86 = vector.shape_cast %85 : vector<1x128xf32> to vector<128xf32>
    %c38 = arith.constant 38 : index
    %c0_60 = arith.constant 0 : index
    %87 = vector.load %arg3[%c38, %c0_60] : memref<49x128xf32, #tpu.memory_space<vmem>>, vector<1x128xf32>
    %88 = vector.shape_cast %87 : vector<1x128xf32> to vector<128xf32>
    %c39 = arith.constant 39 : index
    %c0_61 = arith.constant 0 : index
    %89 = vector.load %arg3[%c39, %c0_61] : memref<49x128xf32, #tpu.memory_space<vmem>>, vector<1x128xf32>
    %90 = vector.shape_cast %89 : vector<1x128xf32> to vector<128xf32>
    %c40 = arith.constant 40 : index
    %c0_62 = arith.constant 0 : index
    %91 = vector.load %arg3[%c40, %c0_62] : memref<49x128xf32, #tpu.memory_space<vmem>>, vector<1x128xf32>
    %92 = vector.shape_cast %91 : vector<1x128xf32> to vector<128xf32>
    %c41 = arith.constant 41 : index
    %c0_63 = arith.constant 0 : index
    %93 = vector.load %arg3[%c41, %c0_63] : memref<49x128xf32, #tpu.memory_space<vmem>>, vector<1x128xf32>
    %94 = vector.shape_cast %93 : vector<1x128xf32> to vector<128xf32>
    %c42 = arith.constant 42 : index
    %c0_64 = arith.constant 0 : index
    %95 = vector.load %arg3[%c42, %c0_64] : memref<49x128xf32, #tpu.memory_space<vmem>>, vector<1x128xf32>
    %96 = vector.shape_cast %95 : vector<1x128xf32> to vector<128xf32>
    %c43 = arith.constant 43 : index
    %c0_65 = arith.constant 0 : index
    %97 = vector.load %arg3[%c43, %c0_65] : memref<49x128xf32, #tpu.memory_space<vmem>>, vector<1x128xf32>
    %98 = vector.shape_cast %97 : vector<1x128xf32> to vector<128xf32>
    %c44 = arith.constant 44 : index
    %c0_66 = arith.constant 0 : index
    %99 = vector.load %arg3[%c44, %c0_66] : memref<49x128xf32, #tpu.memory_space<vmem>>, vector<1x128xf32>
    %100 = vector.shape_cast %99 : vector<1x128xf32> to vector<128xf32>
    %c45 = arith.constant 45 : index
    %c0_67 = arith.constant 0 : index
    %101 = vector.load %arg3[%c45, %c0_67] : memref<49x128xf32, #tpu.memory_space<vmem>>, vector<1x128xf32>
    %102 = vector.shape_cast %101 : vector<1x128xf32> to vector<128xf32>
    %c46 = arith.constant 46 : index
    %c0_68 = arith.constant 0 : index
    %103 = vector.load %arg3[%c46, %c0_68] : memref<49x128xf32, #tpu.memory_space<vmem>>, vector<1x128xf32>
    %104 = vector.shape_cast %103 : vector<1x128xf32> to vector<128xf32>
    %c47 = arith.constant 47 : index
    %c0_69 = arith.constant 0 : index
    %105 = vector.load %arg3[%c47, %c0_69] : memref<49x128xf32, #tpu.memory_space<vmem>>, vector<1x128xf32>
    %106 = vector.shape_cast %105 : vector<1x128xf32> to vector<128xf32>
    %c48 = arith.constant 48 : index
    %c0_70 = arith.constant 0 : index
    %107 = vector.load %arg3[%c48, %c0_70] : memref<49x128xf32, #tpu.memory_space<vmem>>, vector<1x128xf32>
    %108 = vector.shape_cast %107 : vector<1x128xf32> to vector<128xf32>
    %c0_71 = arith.constant 0 : index
    %c0_72 = arith.constant 0 : index
    %c0_73 = arith.constant 0 : index
    %109 = vector.load %arg6[%c0_71, %c0_72, %c0_73] : memref<14x14x128xf32, #tpu.memory_space<vmem>>, vector<8x8x128xf32>
    %110 = vector.shape_cast %12 : vector<128xf32> to vector<1x1x128xf32>
    %111 = vector.broadcast %110 : vector<1x1x128xf32> to vector<8x8x128xf32>
    %112 = arith.mulf %109, %111 : vector<8x8x128xf32>
    %c0_74 = arith.constant 0 : index
    %c1_75 = arith.constant 1 : index
    %c0_76 = arith.constant 0 : index
    %113 = vector.load %arg6[%c0_74, %c1_75, %c0_76] : memref<14x14x128xf32, #tpu.memory_space<vmem>>, vector<8x8x128xf32>
    %114 = vector.shape_cast %14 : vector<128xf32> to vector<1x1x128xf32>
    %115 = vector.broadcast %114 : vector<1x1x128xf32> to vector<8x8x128xf32>
    %116 = arith.mulf %113, %115 : vector<8x8x128xf32>
    %c0_77 = arith.constant 0 : index
    %c2_78 = arith.constant 2 : index
    %c0_79 = arith.constant 0 : index
    %117 = vector.load %arg6[%c0_77, %c2_78, %c0_79] : memref<14x14x128xf32, #tpu.memory_space<vmem>>, vector<8x8x128xf32>
    %118 = vector.shape_cast %16 : vector<128xf32> to vector<1x1x128xf32>
    %119 = vector.broadcast %118 : vector<1x1x128xf32> to vector<8x8x128xf32>
    %120 = arith.mulf %117, %119 : vector<8x8x128xf32>
    %121 = arith.addf %112, %120 : vector<8x8x128xf32>
    %c0_80 = arith.constant 0 : index
    %c3_81 = arith.constant 3 : index
    %c0_82 = arith.constant 0 : index
    %122 = vector.load %arg6[%c0_80, %c3_81, %c0_82] : memref<14x14x128xf32, #tpu.memory_space<vmem>>, vector<8x8x128xf32>
    %123 = vector.shape_cast %18 : vector<128xf32> to vector<1x1x128xf32>
    %124 = vector.broadcast %123 : vector<1x1x128xf32> to vector<8x8x128xf32>
    %125 = arith.mulf %122, %124 : vector<8x8x128xf32>
    %126 = arith.addf %116, %125 : vector<8x8x128xf32>
    %c0_83 = arith.constant 0 : index
    %c4_84 = arith.constant 4 : index
    %c0_85 = arith.constant 0 : index
    %127 = vector.load %arg6[%c0_83, %c4_84, %c0_85] : memref<14x14x128xf32, #tpu.memory_space<vmem>>, vector<8x8x128xf32>
    %128 = vector.shape_cast %20 : vector<128xf32> to vector<1x1x128xf32>
    %129 = vector.broadcast %128 : vector<1x1x128xf32> to vector<8x8x128xf32>
    %130 = arith.mulf %127, %129 : vector<8x8x128xf32>
    %131 = arith.addf %121, %130 : vector<8x8x128xf32>
    %c0_86 = arith.constant 0 : index
    %c5_87 = arith.constant 5 : index
    %c0_88 = arith.constant 0 : index
    %132 = vector.load %arg6[%c0_86, %c5_87, %c0_88] : memref<14x14x128xf32, #tpu.memory_space<vmem>>, vector<8x8x128xf32>
    %133 = vector.shape_cast %22 : vector<128xf32> to vector<1x1x128xf32>
    %134 = vector.broadcast %133 : vector<1x1x128xf32> to vector<8x8x128xf32>
    %135 = arith.mulf %132, %134 : vector<8x8x128xf32>
    %136 = arith.addf %126, %135 : vector<8x8x128xf32>
    %c0_89 = arith.constant 0 : index
    %c6_90 = arith.constant 6 : index
    %c0_91 = arith.constant 0 : index
    %137 = vector.load %arg6[%c0_89, %c6_90, %c0_91] : memref<14x14x128xf32, #tpu.memory_space<vmem>>, vector<8x8x128xf32>
    %138 = vector.shape_cast %24 : vector<128xf32> to vector<1x1x128xf32>
    %139 = vector.broadcast %138 : vector<1x1x128xf32> to vector<8x8x128xf32>
    %140 = arith.mulf %137, %139 : vector<8x8x128xf32>
    %141 = arith.addf %131, %140 : vector<8x8x128xf32>
    %c1_92 = arith.constant 1 : index
    %c0_93 = arith.constant 0 : index
    %c0_94 = arith.constant 0 : index
    %142 = vector.load %arg6[%c1_92, %c0_93, %c0_94] : memref<14x14x128xf32, #tpu.memory_space<vmem>>, vector<8x8x128xf32>
    %143 = vector.shape_cast %26 : vector<128xf32> to vector<1x1x128xf32>
    %144 = vector.broadcast %143 : vector<1x1x128xf32> to vector<8x8x128xf32>
    %145 = arith.mulf %142, %144 : vector<8x8x128xf32>
    %146 = arith.addf %136, %145 : vector<8x8x128xf32>
    %c1_95 = arith.constant 1 : index
    %c1_96 = arith.constant 1 : index
    %c0_97 = arith.constant 0 : index
    %147 = vector.load %arg6[%c1_95, %c1_96, %c0_97] : memref<14x14x128xf32, #tpu.memory_space<vmem>>, vector<8x8x128xf32>
    %148 = vector.shape_cast %28 : vector<128xf32> to vector<1x1x128xf32>
    %149 = vector.broadcast %148 : vector<1x1x128xf32> to vector<8x8x128xf32>
    %150 = arith.mulf %147, %149 : vector<8x8x128xf32>
    %151 = arith.addf %141, %150 : vector<8x8x128xf32>
    %c1_98 = arith.constant 1 : index
    %c2_99 = arith.constant 2 : index
    %c0_100 = arith.constant 0 : index
    %152 = vector.load %arg6[%c1_98, %c2_99, %c0_100] : memref<14x14x128xf32, #tpu.memory_space<vmem>>, vector<8x8x128xf32>
    %153 = vector.shape_cast %30 : vector<128xf32> to vector<1x1x128xf32>
    %154 = vector.broadcast %153 : vector<1x1x128xf32> to vector<8x8x128xf32>
    %155 = arith.mulf %152, %154 : vector<8x8x128xf32>
    %156 = arith.addf %146, %155 : vector<8x8x128xf32>
    %c1_101 = arith.constant 1 : index
    %c3_102 = arith.constant 3 : index
    %c0_103 = arith.constant 0 : index
    %157 = vector.load %arg6[%c1_101, %c3_102, %c0_103] : memref<14x14x128xf32, #tpu.memory_space<vmem>>, vector<8x8x128xf32>
    %158 = vector.shape_cast %32 : vector<128xf32> to vector<1x1x128xf32>
    %159 = vector.broadcast %158 : vector<1x1x128xf32> to vector<8x8x128xf32>
    %160 = arith.mulf %157, %159 : vector<8x8x128xf32>
    %161 = arith.addf %151, %160 : vector<8x8x128xf32>
    %c1_104 = arith.constant 1 : index
    %c4_105 = arith.constant 4 : index
    %c0_106 = arith.constant 0 : index
    %162 = vector.load %arg6[%c1_104, %c4_105, %c0_106] : memref<14x14x128xf32, #tpu.memory_space<vmem>>, vector<8x8x128xf32>
    %163 = vector.shape_cast %34 : vector<128xf32> to vector<1x1x128xf32>
    %164 = vector.broadcast %163 : vector<1x1x128xf32> to vector<8x8x128xf32>
    %165 = arith.mulf %162, %164 : vector<8x8x128xf32>
    %166 = arith.addf %156, %165 : vector<8x8x128xf32>
    %c1_107 = arith.constant 1 : index
    %c5_108 = arith.constant 5 : index
    %c0_109 = arith.constant 0 : index
    %167 = vector.load %arg6[%c1_107, %c5_108, %c0_109] : memref<14x14x128xf32, #tpu.memory_space<vmem>>, vector<8x8x128xf32>
    %168 = vector.shape_cast %36 : vector<128xf32> to vector<1x1x128xf32>
    %169 = vector.broadcast %168 : vector<1x1x128xf32> to vector<8x8x128xf32>
    %170 = arith.mulf %167, %169 : vector<8x8x128xf32>
    %171 = arith.addf %161, %170 : vector<8x8x128xf32>
    %c1_110 = arith.constant 1 : index
    %c6_111 = arith.constant 6 : index
    %c0_112 = arith.constant 0 : index
    %172 = vector.load %arg6[%c1_110, %c6_111, %c0_112] : memref<14x14x128xf32, #tpu.memory_space<vmem>>, vector<8x8x128xf32>
    %173 = vector.shape_cast %38 : vector<128xf32> to vector<1x1x128xf32>
    %174 = vector.broadcast %173 : vector<1x1x128xf32> to vector<8x8x128xf32>
    %175 = arith.mulf %172, %174 : vector<8x8x128xf32>
    %176 = arith.addf %166, %175 : vector<8x8x128xf32>
    %c2_113 = arith.constant 2 : index
    %c0_114 = arith.constant 0 : index
    %c0_115 = arith.constant 0 : index
    %177 = vector.load %arg6[%c2_113, %c0_114, %c0_115] : memref<14x14x128xf32, #tpu.memory_space<vmem>>, vector<8x8x128xf32>
    %178 = vector.shape_cast %40 : vector<128xf32> to vector<1x1x128xf32>
    %179 = vector.broadcast %178 : vector<1x1x128xf32> to vector<8x8x128xf32>
    %180 = arith.mulf %177, %179 : vector<8x8x128xf32>
    %181 = arith.addf %171, %180 : vector<8x8x128xf32>
    %c2_116 = arith.constant 2 : index
    %c1_117 = arith.constant 1 : index
    %c0_118 = arith.constant 0 : index
    %182 = vector.load %arg6[%c2_116, %c1_117, %c0_118] : memref<14x14x128xf32, #tpu.memory_space<vmem>>, vector<8x8x128xf32>
    %183 = vector.shape_cast %42 : vector<128xf32> to vector<1x1x128xf32>
    %184 = vector.broadcast %183 : vector<1x1x128xf32> to vector<8x8x128xf32>
    %185 = arith.mulf %182, %184 : vector<8x8x128xf32>
    %186 = arith.addf %176, %185 : vector<8x8x128xf32>
    %c2_119 = arith.constant 2 : index
    %c2_120 = arith.constant 2 : index
    %c0_121 = arith.constant 0 : index
    %187 = vector.load %arg6[%c2_119, %c2_120, %c0_121] : memref<14x14x128xf32, #tpu.memory_space<vmem>>, vector<8x8x128xf32>
    %188 = vector.shape_cast %44 : vector<128xf32> to vector<1x1x128xf32>
    %189 = vector.broadcast %188 : vector<1x1x128xf32> to vector<8x8x128xf32>
    %190 = arith.mulf %187, %189 : vector<8x8x128xf32>
    %191 = arith.addf %181, %190 : vector<8x8x128xf32>
    %c2_122 = arith.constant 2 : index
    %c3_123 = arith.constant 3 : index
    %c0_124 = arith.constant 0 : index
    %192 = vector.load %arg6[%c2_122, %c3_123, %c0_124] : memref<14x14x128xf32, #tpu.memory_space<vmem>>, vector<8x8x128xf32>
    %193 = vector.shape_cast %46 : vector<128xf32> to vector<1x1x128xf32>
    %194 = vector.broadcast %193 : vector<1x1x128xf32> to vector<8x8x128xf32>
    %195 = arith.mulf %192, %194 : vector<8x8x128xf32>
    %196 = arith.addf %186, %195 : vector<8x8x128xf32>
    %c2_125 = arith.constant 2 : index
    %c4_126 = arith.constant 4 : index
    %c0_127 = arith.constant 0 : index
    %197 = vector.load %arg6[%c2_125, %c4_126, %c0_127] : memref<14x14x128xf32, #tpu.memory_space<vmem>>, vector<8x8x128xf32>
    %198 = vector.shape_cast %48 : vector<128xf32> to vector<1x1x128xf32>
    %199 = vector.broadcast %198 : vector<1x1x128xf32> to vector<8x8x128xf32>
    %200 = arith.mulf %197, %199 : vector<8x8x128xf32>
    %201 = arith.addf %191, %200 : vector<8x8x128xf32>
    %c2_128 = arith.constant 2 : index
    %c5_129 = arith.constant 5 : index
    %c0_130 = arith.constant 0 : index
    %202 = vector.load %arg6[%c2_128, %c5_129, %c0_130] : memref<14x14x128xf32, #tpu.memory_space<vmem>>, vector<8x8x128xf32>
    %203 = vector.shape_cast %50 : vector<128xf32> to vector<1x1x128xf32>
    %204 = vector.broadcast %203 : vector<1x1x128xf32> to vector<8x8x128xf32>
    %205 = arith.mulf %202, %204 : vector<8x8x128xf32>
    %206 = arith.addf %196, %205 : vector<8x8x128xf32>
    %c2_131 = arith.constant 2 : index
    %c6_132 = arith.constant 6 : index
    %c0_133 = arith.constant 0 : index
    %207 = vector.load %arg6[%c2_131, %c6_132, %c0_133] : memref<14x14x128xf32, #tpu.memory_space<vmem>>, vector<8x8x128xf32>
    %208 = vector.shape_cast %52 : vector<128xf32> to vector<1x1x128xf32>
    %209 = vector.broadcast %208 : vector<1x1x128xf32> to vector<8x8x128xf32>
    %210 = arith.mulf %207, %209 : vector<8x8x128xf32>
    %211 = arith.addf %201, %210 : vector<8x8x128xf32>
    %c3_134 = arith.constant 3 : index
    %c0_135 = arith.constant 0 : index
    %c0_136 = arith.constant 0 : index
    %212 = vector.load %arg6[%c3_134, %c0_135, %c0_136] : memref<14x14x128xf32, #tpu.memory_space<vmem>>, vector<8x8x128xf32>
    %213 = vector.shape_cast %54 : vector<128xf32> to vector<1x1x128xf32>
    %214 = vector.broadcast %213 : vector<1x1x128xf32> to vector<8x8x128xf32>
    %215 = arith.mulf %212, %214 : vector<8x8x128xf32>
    %216 = arith.addf %206, %215 : vector<8x8x128xf32>
    %c3_137 = arith.constant 3 : index
    %c1_138 = arith.constant 1 : index
    %c0_139 = arith.constant 0 : index
    %217 = vector.load %arg6[%c3_137, %c1_138, %c0_139] : memref<14x14x128xf32, #tpu.memory_space<vmem>>, vector<8x8x128xf32>
    %218 = vector.shape_cast %56 : vector<128xf32> to vector<1x1x128xf32>
    %219 = vector.broadcast %218 : vector<1x1x128xf32> to vector<8x8x128xf32>
    %220 = arith.mulf %217, %219 : vector<8x8x128xf32>
    %221 = arith.addf %211, %220 : vector<8x8x128xf32>
    %c3_140 = arith.constant 3 : index
    %c2_141 = arith.constant 2 : index
    %c0_142 = arith.constant 0 : index
    %222 = vector.load %arg6[%c3_140, %c2_141, %c0_142] : memref<14x14x128xf32, #tpu.memory_space<vmem>>, vector<8x8x128xf32>
    %223 = vector.shape_cast %58 : vector<128xf32> to vector<1x1x128xf32>
    %224 = vector.broadcast %223 : vector<1x1x128xf32> to vector<8x8x128xf32>
    %225 = arith.mulf %222, %224 : vector<8x8x128xf32>
    %226 = arith.addf %216, %225 : vector<8x8x128xf32>
    %c3_143 = arith.constant 3 : index
    %c3_144 = arith.constant 3 : index
    %c0_145 = arith.constant 0 : index
    %227 = vector.load %arg6[%c3_143, %c3_144, %c0_145] : memref<14x14x128xf32, #tpu.memory_space<vmem>>, vector<8x8x128xf32>
    %228 = vector.shape_cast %60 : vector<128xf32> to vector<1x1x128xf32>
    %229 = vector.broadcast %228 : vector<1x1x128xf32> to vector<8x8x128xf32>
    %230 = arith.mulf %227, %229 : vector<8x8x128xf32>
    %231 = arith.addf %221, %230 : vector<8x8x128xf32>
    %c3_146 = arith.constant 3 : index
    %c4_147 = arith.constant 4 : index
    %c0_148 = arith.constant 0 : index
    %232 = vector.load %arg6[%c3_146, %c4_147, %c0_148] : memref<14x14x128xf32, #tpu.memory_space<vmem>>, vector<8x8x128xf32>
    %233 = vector.shape_cast %62 : vector<128xf32> to vector<1x1x128xf32>
    %234 = vector.broadcast %233 : vector<1x1x128xf32> to vector<8x8x128xf32>
    %235 = arith.mulf %232, %234 : vector<8x8x128xf32>
    %236 = arith.addf %226, %235 : vector<8x8x128xf32>
    %c3_149 = arith.constant 3 : index
    %c5_150 = arith.constant 5 : index
    %c0_151 = arith.constant 0 : index
    %237 = vector.load %arg6[%c3_149, %c5_150, %c0_151] : memref<14x14x128xf32, #tpu.memory_space<vmem>>, vector<8x8x128xf32>
    %238 = vector.shape_cast %64 : vector<128xf32> to vector<1x1x128xf32>
    %239 = vector.broadcast %238 : vector<1x1x128xf32> to vector<8x8x128xf32>
    %240 = arith.mulf %237, %239 : vector<8x8x128xf32>
    %241 = arith.addf %231, %240 : vector<8x8x128xf32>
    %c3_152 = arith.constant 3 : index
    %c6_153 = arith.constant 6 : index
    %c0_154 = arith.constant 0 : index
    %242 = vector.load %arg6[%c3_152, %c6_153, %c0_154] : memref<14x14x128xf32, #tpu.memory_space<vmem>>, vector<8x8x128xf32>
    %243 = vector.shape_cast %66 : vector<128xf32> to vector<1x1x128xf32>
    %244 = vector.broadcast %243 : vector<1x1x128xf32> to vector<8x8x128xf32>
    %245 = arith.mulf %242, %244 : vector<8x8x128xf32>
    %246 = arith.addf %236, %245 : vector<8x8x128xf32>
    %c4_155 = arith.constant 4 : index
    %c0_156 = arith.constant 0 : index
    %c0_157 = arith.constant 0 : index
    %247 = vector.load %arg6[%c4_155, %c0_156, %c0_157] : memref<14x14x128xf32, #tpu.memory_space<vmem>>, vector<8x8x128xf32>
    %248 = vector.shape_cast %68 : vector<128xf32> to vector<1x1x128xf32>
    %249 = vector.broadcast %248 : vector<1x1x128xf32> to vector<8x8x128xf32>
    %250 = arith.mulf %247, %249 : vector<8x8x128xf32>
    %251 = arith.addf %241, %250 : vector<8x8x128xf32>
    %c4_158 = arith.constant 4 : index
    %c1_159 = arith.constant 1 : index
    %c0_160 = arith.constant 0 : index
    %252 = vector.load %arg6[%c4_158, %c1_159, %c0_160] : memref<14x14x128xf32, #tpu.memory_space<vmem>>, vector<8x8x128xf32>
    %253 = vector.shape_cast %70 : vector<128xf32> to vector<1x1x128xf32>
    %254 = vector.broadcast %253 : vector<1x1x128xf32> to vector<8x8x128xf32>
    %255 = arith.mulf %252, %254 : vector<8x8x128xf32>
    %256 = arith.addf %246, %255 : vector<8x8x128xf32>
    %c4_161 = arith.constant 4 : index
    %c2_162 = arith.constant 2 : index
    %c0_163 = arith.constant 0 : index
    %257 = vector.load %arg6[%c4_161, %c2_162, %c0_163] : memref<14x14x128xf32, #tpu.memory_space<vmem>>, vector<8x8x128xf32>
    %258 = vector.shape_cast %72 : vector<128xf32> to vector<1x1x128xf32>
    %259 = vector.broadcast %258 : vector<1x1x128xf32> to vector<8x8x128xf32>
    %260 = arith.mulf %257, %259 : vector<8x8x128xf32>
    %261 = arith.addf %251, %260 : vector<8x8x128xf32>
    %c4_164 = arith.constant 4 : index
    %c3_165 = arith.constant 3 : index
    %c0_166 = arith.constant 0 : index
    %262 = vector.load %arg6[%c4_164, %c3_165, %c0_166] : memref<14x14x128xf32, #tpu.memory_space<vmem>>, vector<8x8x128xf32>
    %263 = vector.shape_cast %74 : vector<128xf32> to vector<1x1x128xf32>
    %264 = vector.broadcast %263 : vector<1x1x128xf32> to vector<8x8x128xf32>
    %265 = arith.mulf %262, %264 : vector<8x8x128xf32>
    %266 = arith.addf %256, %265 : vector<8x8x128xf32>
    %c4_167 = arith.constant 4 : index
    %c4_168 = arith.constant 4 : index
    %c0_169 = arith.constant 0 : index
    %267 = vector.load %arg6[%c4_167, %c4_168, %c0_169] : memref<14x14x128xf32, #tpu.memory_space<vmem>>, vector<8x8x128xf32>
    %268 = vector.shape_cast %76 : vector<128xf32> to vector<1x1x128xf32>
    %269 = vector.broadcast %268 : vector<1x1x128xf32> to vector<8x8x128xf32>
    %270 = arith.mulf %267, %269 : vector<8x8x128xf32>
    %271 = arith.addf %261, %270 : vector<8x8x128xf32>
    %c4_170 = arith.constant 4 : index
    %c5_171 = arith.constant 5 : index
    %c0_172 = arith.constant 0 : index
    %272 = vector.load %arg6[%c4_170, %c5_171, %c0_172] : memref<14x14x128xf32, #tpu.memory_space<vmem>>, vector<8x8x128xf32>
    %273 = vector.shape_cast %78 : vector<128xf32> to vector<1x1x128xf32>
    %274 = vector.broadcast %273 : vector<1x1x128xf32> to vector<8x8x128xf32>
    %275 = arith.mulf %272, %274 : vector<8x8x128xf32>
    %276 = arith.addf %266, %275 : vector<8x8x128xf32>
    %c4_173 = arith.constant 4 : index
    %c6_174 = arith.constant 6 : index
    %c0_175 = arith.constant 0 : index
    %277 = vector.load %arg6[%c4_173, %c6_174, %c0_175] : memref<14x14x128xf32, #tpu.memory_space<vmem>>, vector<8x8x128xf32>
    %278 = vector.shape_cast %80 : vector<128xf32> to vector<1x1x128xf32>
    %279 = vector.broadcast %278 : vector<1x1x128xf32> to vector<8x8x128xf32>
    %280 = arith.mulf %277, %279 : vector<8x8x128xf32>
    %281 = arith.addf %271, %280 : vector<8x8x128xf32>
    %c5_176 = arith.constant 5 : index
    %c0_177 = arith.constant 0 : index
    %c0_178 = arith.constant 0 : index
    %282 = vector.load %arg6[%c5_176, %c0_177, %c0_178] : memref<14x14x128xf32, #tpu.memory_space<vmem>>, vector<8x8x128xf32>
    %283 = vector.shape_cast %82 : vector<128xf32> to vector<1x1x128xf32>
    %284 = vector.broadcast %283 : vector<1x1x128xf32> to vector<8x8x128xf32>
    %285 = arith.mulf %282, %284 : vector<8x8x128xf32>
    %286 = arith.addf %276, %285 : vector<8x8x128xf32>
    %c5_179 = arith.constant 5 : index
    %c1_180 = arith.constant 1 : index
    %c0_181 = arith.constant 0 : index
    %287 = vector.load %arg6[%c5_179, %c1_180, %c0_181] : memref<14x14x128xf32, #tpu.memory_space<vmem>>, vector<8x8x128xf32>
    %288 = vector.shape_cast %84 : vector<128xf32> to vector<1x1x128xf32>
    %289 = vector.broadcast %288 : vector<1x1x128xf32> to vector<8x8x128xf32>
    %290 = arith.mulf %287, %289 : vector<8x8x128xf32>
    %291 = arith.addf %281, %290 : vector<8x8x128xf32>
    %c5_182 = arith.constant 5 : index
    %c2_183 = arith.constant 2 : index
    %c0_184 = arith.constant 0 : index
    %292 = vector.load %arg6[%c5_182, %c2_183, %c0_184] : memref<14x14x128xf32, #tpu.memory_space<vmem>>, vector<8x8x128xf32>
    %293 = vector.shape_cast %86 : vector<128xf32> to vector<1x1x128xf32>
    %294 = vector.broadcast %293 : vector<1x1x128xf32> to vector<8x8x128xf32>
    %295 = arith.mulf %292, %294 : vector<8x8x128xf32>
    %296 = arith.addf %286, %295 : vector<8x8x128xf32>
    %c5_185 = arith.constant 5 : index
    %c3_186 = arith.constant 3 : index
    %c0_187 = arith.constant 0 : index
    %297 = vector.load %arg6[%c5_185, %c3_186, %c0_187] : memref<14x14x128xf32, #tpu.memory_space<vmem>>, vector<8x8x128xf32>
    %298 = vector.shape_cast %88 : vector<128xf32> to vector<1x1x128xf32>
    %299 = vector.broadcast %298 : vector<1x1x128xf32> to vector<8x8x128xf32>
    %300 = arith.mulf %297, %299 : vector<8x8x128xf32>
    %301 = arith.addf %291, %300 : vector<8x8x128xf32>
    %c5_188 = arith.constant 5 : index
    %c4_189 = arith.constant 4 : index
    %c0_190 = arith.constant 0 : index
    %302 = vector.load %arg6[%c5_188, %c4_189, %c0_190] : memref<14x14x128xf32, #tpu.memory_space<vmem>>, vector<8x8x128xf32>
    %303 = vector.shape_cast %90 : vector<128xf32> to vector<1x1x128xf32>
    %304 = vector.broadcast %303 : vector<1x1x128xf32> to vector<8x8x128xf32>
    %305 = arith.mulf %302, %304 : vector<8x8x128xf32>
    %306 = arith.addf %296, %305 : vector<8x8x128xf32>
    %c5_191 = arith.constant 5 : index
    %c5_192 = arith.constant 5 : index
    %c0_193 = arith.constant 0 : index
    %307 = vector.load %arg6[%c5_191, %c5_192, %c0_193] : memref<14x14x128xf32, #tpu.memory_space<vmem>>, vector<8x8x128xf32>
    %308 = vector.shape_cast %92 : vector<128xf32> to vector<1x1x128xf32>
    %309 = vector.broadcast %308 : vector<1x1x128xf32> to vector<8x8x128xf32>
    %310 = arith.mulf %307, %309 : vector<8x8x128xf32>
    %311 = arith.addf %301, %310 : vector<8x8x128xf32>
    %c5_194 = arith.constant 5 : index
    %c6_195 = arith.constant 6 : index
    %c0_196 = arith.constant 0 : index
    %312 = vector.load %arg6[%c5_194, %c6_195, %c0_196] : memref<14x14x128xf32, #tpu.memory_space<vmem>>, vector<8x8x128xf32>
    %313 = vector.shape_cast %94 : vector<128xf32> to vector<1x1x128xf32>
    %314 = vector.broadcast %313 : vector<1x1x128xf32> to vector<8x8x128xf32>
    %315 = arith.mulf %312, %314 : vector<8x8x128xf32>
    %316 = arith.addf %306, %315 : vector<8x8x128xf32>
    %c6_197 = arith.constant 6 : index
    %c0_198 = arith.constant 0 : index
    %c0_199 = arith.constant 0 : index
    %317 = vector.load %arg6[%c6_197, %c0_198, %c0_199] : memref<14x14x128xf32, #tpu.memory_space<vmem>>, vector<8x8x128xf32>
    %318 = vector.shape_cast %96 : vector<128xf32> to vector<1x1x128xf32>
    %319 = vector.broadcast %318 : vector<1x1x128xf32> to vector<8x8x128xf32>
    %320 = arith.mulf %317, %319 : vector<8x8x128xf32>
    %321 = arith.addf %311, %320 : vector<8x8x128xf32>
    %c6_200 = arith.constant 6 : index
    %c1_201 = arith.constant 1 : index
    %c0_202 = arith.constant 0 : index
    %322 = vector.load %arg6[%c6_200, %c1_201, %c0_202] : memref<14x14x128xf32, #tpu.memory_space<vmem>>, vector<8x8x128xf32>
    %323 = vector.shape_cast %98 : vector<128xf32> to vector<1x1x128xf32>
    %324 = vector.broadcast %323 : vector<1x1x128xf32> to vector<8x8x128xf32>
    %325 = arith.mulf %322, %324 : vector<8x8x128xf32>
    %326 = arith.addf %316, %325 : vector<8x8x128xf32>
    %c6_203 = arith.constant 6 : index
    %c2_204 = arith.constant 2 : index
    %c0_205 = arith.constant 0 : index
    %327 = vector.load %arg6[%c6_203, %c2_204, %c0_205] : memref<14x14x128xf32, #tpu.memory_space<vmem>>, vector<8x8x128xf32>
    %328 = vector.shape_cast %100 : vector<128xf32> to vector<1x1x128xf32>
    %329 = vector.broadcast %328 : vector<1x1x128xf32> to vector<8x8x128xf32>
    %330 = arith.mulf %327, %329 : vector<8x8x128xf32>
    %331 = arith.addf %321, %330 : vector<8x8x128xf32>
    %c6_206 = arith.constant 6 : index
    %c3_207 = arith.constant 3 : index
    %c0_208 = arith.constant 0 : index
    %332 = vector.load %arg6[%c6_206, %c3_207, %c0_208] : memref<14x14x128xf32, #tpu.memory_space<vmem>>, vector<8x8x128xf32>
    %333 = vector.shape_cast %102 : vector<128xf32> to vector<1x1x128xf32>
    %334 = vector.broadcast %333 : vector<1x1x128xf32> to vector<8x8x128xf32>
    %335 = arith.mulf %332, %334 : vector<8x8x128xf32>
    %336 = arith.addf %326, %335 : vector<8x8x128xf32>
    %c6_209 = arith.constant 6 : index
    %c4_210 = arith.constant 4 : index
    %c0_211 = arith.constant 0 : index
    %337 = vector.load %arg6[%c6_209, %c4_210, %c0_211] : memref<14x14x128xf32, #tpu.memory_space<vmem>>, vector<8x8x128xf32>
    %338 = vector.shape_cast %104 : vector<128xf32> to vector<1x1x128xf32>
    %339 = vector.broadcast %338 : vector<1x1x128xf32> to vector<8x8x128xf32>
    %340 = arith.mulf %337, %339 : vector<8x8x128xf32>
    %341 = arith.addf %331, %340 : vector<8x8x128xf32>
    %c6_212 = arith.constant 6 : index
    %c5_213 = arith.constant 5 : index
    %c0_214 = arith.constant 0 : index
    %342 = vector.load %arg6[%c6_212, %c5_213, %c0_214] : memref<14x14x128xf32, #tpu.memory_space<vmem>>, vector<8x8x128xf32>
    %343 = vector.shape_cast %106 : vector<128xf32> to vector<1x1x128xf32>
    %344 = vector.broadcast %343 : vector<1x1x128xf32> to vector<8x8x128xf32>
    %345 = arith.mulf %342, %344 : vector<8x8x128xf32>
    %346 = arith.addf %336, %345 : vector<8x8x128xf32>
    %c6_215 = arith.constant 6 : index
    %c6_216 = arith.constant 6 : index
    %c0_217 = arith.constant 0 : index
    %347 = vector.load %arg6[%c6_215, %c6_216, %c0_217] : memref<14x14x128xf32, #tpu.memory_space<vmem>>, vector<8x8x128xf32>
    %348 = vector.shape_cast %108 : vector<128xf32> to vector<1x1x128xf32>
    %349 = vector.broadcast %348 : vector<1x1x128xf32> to vector<8x8x128xf32>
    %350 = arith.mulf %347, %349 : vector<8x8x128xf32>
    %351 = arith.addf %341, %350 : vector<8x8x128xf32>
    %352 = arith.addf %351, %346 : vector<8x8x128xf32>
    %c0_218 = arith.constant 0 : index
    %c0_219 = arith.constant 0 : index
    %353 = vector.load %arg4[%c0_218, %c0_219] : memref<1x128xf32, #tpu.memory_space<vmem>>, vector<1x128xf32>
    %354 = vector.shape_cast %353 : vector<1x128xf32> to vector<1x1x128xf32>
    %355 = vector.broadcast %354 : vector<1x1x128xf32> to vector<8x8x128xf32>
    %356 = arith.addf %352, %355 : vector<8x8x128xf32>
    %c0_220 = arith.constant 0 : index
    %c0_221 = arith.constant 0 : index
    %c0_222 = arith.constant 0 : index
    %c0_223 = arith.constant 0 : index
    %357 = vector.load %arg5[%c0_220, %c0_221, %c0_222, %c0_223] : memref<1x8x8x128xf32, #tpu.memory_space<vmem>>, vector<1x8x8x128xf32>
    %358 = vector.shape_cast %357 : vector<1x8x8x128xf32> to vector<8x8x128xf32>
    %359 = vector.shape_cast %356 : vector<8x8x128xf32> to vector<1x8x8x128xf32>
    tpu.vector_store %arg5[%c0_220, %c0_221, %c0_222, %c0_223], %359 {strides = array<i32>} : memref<1x8x8x128xf32, #tpu.memory_space<vmem>>, vector<1x8x8x128xf32>,
    return
  }
  func.func @transform_0(%arg0: i32, %arg1: i32) -> (i32, i32, i32, i32) {
    %c0_i32 = arith.constant 0 : i32
    %c0_i32_0 = arith.constant 0 : i32
    %c0_i32_1 = arith.constant 0 : i32
    return %arg0, %c0_i32, %c0_i32_0, %arg1 : i32, i32, i32, i32
  }
  func.func @transform_1(%arg0: i32, %arg1: i32) -> (i32, i32) {
    %c0_i32 = arith.constant 0 : i32
    %c0_i32_0 = arith.constant 0 : i32
    return %c0_i32, %arg1 : i32, i32
  }
  func.func @transform_2(%arg0: i32, %arg1: i32) -> (i32, i32) {
    %c0_i32 = arith.constant 0 : i32
    %c0_i32_0 = arith.constant 0 : i32
    return %c0_i32, %arg1 : i32, i32
  }
  func.func @transform_3(%arg0: i32, %arg1: i32) -> (i32, i32, i32, i32) {
    %c0_i32 = arith.constant 0 : i32
    %c0_i32_0 = arith.constant 0 : i32
    %c0_i32_1 = arith.constant 0 : i32
    return %arg0, %c0_i32, %c0_i32_0, %arg1 : i32, i32, i32, i32
  }
}

</mosaic_0001>

<llo_original>
// kernel: ppeg_forward.1
$region0: #{ppeg_forward.1}
  #allocation0 [shape = 'u32[]', space=smem, size = 0x4, offset = 0x4, fixed_abs, tag = 'smem constant byte address 0x4 - core index']
  #allocation1 [shape = 'u32[72,128]{1,0:T(1,128)}', space=vmem, size = 0x9000, scoped, tag = 'internal scratch']
  #allocation2 [shape = 'f32[14,14,128]{2,1,0:T(8,128)}', space=vmem, size = 0x1c000, scoped, tag = 'scratch operand']
  %s0 = inlined_call_operand.vmem [shape: f32[2,8,8,128], index: 0, kind: input, shape index: {}]
  %s1 = inlined_call_operand.vmem [shape: f32[49,128], index: 1, kind: input, shape index: {}]
  %s2 = inlined_call_operand.vmem [shape: f32[1,128], index: 2, kind: input, shape index: {}]
  %s3 = inlined_call_operand.vmem [shape: f32[2,8,8,128], index: 3, kind: output, shape index: {}]
  %s4 = sld [smem:[#allocation0]]
  $region45: #{ppeg_forward.1} parent=0
    _
  %s6 = ssub.s32 1, %s4
  %s7 = scalar_select 0, %s6, %s4
  loop: start=0, step=1, limit=4
  $region2: #{ppeg_forward.1} parent=0 // loop_pre_header
    _
  $region3: #{ppeg_forward.1} parent=0 // loop_header
    %s9 = sphi 0, %s13
    %p10 = scmp.ge.s32.totalorder %s9, 4
    %s16 = sphi 0, %s28
    %s17 = sphi 0, %s24
    %s18 = sphi 0, %s16
    %s19 = sphi 0, %s17
    %s20 = sphi 0, %s18
    %s21 = sphi 0, %s19
    %s33 = sphi 0, %s35
    %s36 = sphi 0, %s33
    %s37 = sphi 0, %s36
    %s53 = sphi 0, %s37
    %s59 = sphi 0, %s61
    %s62 = sphi 0, %s59
    %s63 = sphi 0, %s62
    %s79 = sphi 0, %s63
    %s85 = sphi 0, %s87
    %s88 = sphi 0, %s85
    %s89 = sphi 0, %s88
    %s105 = sphi 0, %s89
    %s113 = sphi 0, %s115
    %s116 = sphi 0, %s113
    %s117 = sphi 0, %s116
    %s133 = sphi 0, %s117
  $region4: #{ppeg_forward.1} parent=0 // loop_header_branch
    %12 = sbr.rel (%p10) target = $region8
  $region5: #{ppeg_forward.1} parent=0 // loop_body
    %s14 = ssub.s32 %s9, 1
    %s15 = ssub.s32 %s9, 2
    %s22 = sadd.s32 1, %s17
    %p23 = scmp.ge.s32.totalorder %s22, 1
    %s24 = scalar_select %p23, 0, %s22
    %s25 = sadd.s32 1, %s16
    %s26 = scalar_select %p23, %s25, %s16
    %p27 = scmp.ge.s32.totalorder %s26, 2
    %s28 = scalar_select %p27, 0, %s26
    %s29 = ssub.s32 %s16, %s28
    %s30 = ssub.s32 %s17, %s24
    %s31 = sor.u32 %s29, %s30
    %p32 = scmp.eq.s32.totalorder %s31, 0
    %s34 = sadd.s32 %s33, 1
    %s35 = scalar_select %p32, %s33, %s34
    %p38 = pneg %p32
    %p39 = scmp.eq.s32.totalorder %s9, 1
    %p40 = por %p38, %p39
    %p41 = scmp.ne.s32.totalorder %s33, %s36
    %p42 = scmp.eq.s32.totalorder %s9, 0
    %p43 = por %p41, %p42
    %p44 = scmp.ne.s32.totalorder %s33, %s36
    %p45 = scmp.eq.s32.totalorder %s14, 1
    %p46 = por %p44, %p45
    %p47 = scmp.ne.s32.totalorder %s36, %s37
    %p48 = scmp.eq.s32.totalorder %s14, 0
    %p49 = por %p47, %p48
    %p50 = scmp.ne.s32.totalorder %s36, %s37
    %p51 = scmp.eq.s32.totalorder %s15, 1
    %p52 = por %p50, %p51
    %p54 = scmp.ne.s32.totalorder %s37, %s53
    %p55 = scmp.eq.s32.totalorder %s15, 0
    %p56 = por %p54, %p55
    %s57 = ssub.s32 %s17, %s24
    %p58 = scmp.eq.s32.totalorder %s57, 0
    %s60 = sadd.s32 %s59, 1
    %s61 = scalar_select %p58, %s59, %s60
    %p64 = pneg %p58
    %p65 = scmp.eq.s32.totalorder %s9, 1
    %p66 = por %p64, %p65
    %p67 = scmp.ne.s32.totalorder %s59, %s62
    %p68 = scmp.eq.s32.totalorder %s9, 0
    %p69 = por %p67, %p68
    %p70 = scmp.ne.s32.totalorder %s59, %s62
    %p71 = scmp.eq.s32.totalorder %s14, 1
    %p72 = por %p70, %p71
    %p73 = scmp.ne.s32.totalorder %s62, %s63
    %p74 = scmp.eq.s32.totalorder %s14, 0
    %p75 = por %p73, %p74
    %p76 = scmp.ne.s32.totalorder %s62, %s63
    %p77 = scmp.eq.s32.totalorder %s15, 1
    %p78 = por %p76, %p77
    %p80 = scmp.ne.s32.totalorder %s63, %s79
    %p81 = scmp.eq.s32.totalorder %s15, 0
    %p82 = por %p80, %p81
    %s83 = ssub.s32 %s17, %s24
    %p84 = scmp.eq.s32.totalorder %s83, 0
    %s86 = sadd.s32 %s85, 1
    %s87 = scalar_select %p84, %s85, %s86
    %p90 = pneg %p84
    %p91 = scmp.eq.s32.totalorder %s9, 1
    %p92 = por %p90, %p91
    %p93 = scmp.ne.s32.totalorder %s85, %s88
    %p94 = scmp.eq.s32.totalorder %s9, 0
    %p95 = por %p93, %p94
    %p96 = scmp.ne.s32.totalorder %s85, %s88
    %p97 = scmp.eq.s32.totalorder %s14, 1
    %p98 = por %p96, %p97
    %p99 = scmp.ne.s32.totalorder %s88, %s89
    %p100 = scmp.eq.s32.totalorder %s14, 0
    %p101 = por %p99, %p100
    %p102 = scmp.ne.s32.totalorder %s88, %s89
    %p103 = scmp.eq.s32.totalorder %s15, 1
    %p104 = por %p102, %p103
    %p106 = scmp.ne.s32.totalorder %s89, %s105
    %p107 = scmp.eq.s32.totalorder %s15, 0
    %p108 = por %p106, %p107
    %s109 = ssub.s32 %s16, %s28
    %s110 = ssub.s32 %s17, %s24
    %s111 = sor.u32 %s109, %s110
    %p112 = scmp.eq.s32.totalorder %s111, 0
    %s114 = sadd.s32 %s113, 1
    %s115 = scalar_select %p112, %s113, %s114
    %p118 = pneg %p112
    %p119 = scmp.eq.s32.totalorder %s9, 1
    %p120 = por %p118, %p119
    %p121 = scmp.ne.s32.totalorder %s113, %s116
    %p122 = scmp.eq.s32.totalorder %s9, 0
    %p123 = por %p121, %p122
    %p124 = scmp.ne.s32.totalorder %s113, %s116
    %p125 = scmp.eq.s32.totalorder %s14, 1
    %p126 = por %p124, %p125
    %p127 = scmp.ne.s32.totalorder %s116, %s117
    %p128 = scmp.eq.s32.totalorder %s14, 0
    %p129 = por %p127, %p128
    %p130 = scmp.ne.s32.totalorder %s116, %s117
    %p131 = scmp.eq.s32.totalorder %s15, 1
    %p132 = por %p130, %p131
    %p134 = scmp.ne.s32.totalorder %s117, %s133
    %p135 = scmp.eq.s32.totalorder %s15, 0
    %p136 = por %p134, %p135
    %p137 = scmp.le.s32.totalorder 1, %s9
    %p138 = scmp.lt.s32.totalorder %s9, 3
    %p139 = pnand %p137, %p138
    %p140 = pneg %p139
    // Predicated region
    $region9: #{ppeg_forward.1} parent=5 // pred_check
      _
    $region10: #{ppeg_forward.1} parent=5 // pred_check_branch
      %142 = sbr.rel (%p139) target = $region12
    $region11: #{ppeg_forward.1} parent=5 // pred_region
      %s143 = ssub.s32 %s9, 1
      // Predicated region
      $region13: #{ppeg_forward.1} parent=11 // pred_check
        %p144 = pneg %p75
      $region14: #{ppeg_forward.1} parent=11 // pred_check_branch
        %146 = sbr.rel (%p144) target = $region16
      $region15: #{ppeg_forward.1} parent=11 // pred_region
        %p147 = scmp.lt.s32.totalorder %s19, 0
        %s148 = scalar_select %p147, %s19, 0
        %s149 = smul.addr %s148, 8
        %s150 = scalar_lea.vmem %s1, %s149
      $region16: #{ppeg_forward.1} parent=11 // pred_fallthru
        _
      // Predicated region
      $region17: #{ppeg_forward.1} parent=11 // pred_check
        %p151 = pneg %p101
      $region18: #{ppeg_forward.1} parent=11 // pred_check_branch
        %153 = sbr.rel (%p151) target = $region20
      $region19: #{ppeg_forward.1} parent=11 // pred_region
        %p154 = scmp.lt.s32.totalorder %s19, 0
        %s155 = scalar_select %p154, %s19, 0
        %s156 = scalar_lea.vmem %s2, %s155
      $region20: #{ppeg_forward.1} parent=11 // pred_fallthru
        _
    $region12: #{ppeg_forward.1} parent=5 // pred_fallthru
      _
    %p157 = scmp.lt.s32.totalorder %s9, 2
    // Predicated region
    $region21: #{ppeg_forward.1} parent=5 // pred_check
      %p158 = pneg %p157
    $region22: #{ppeg_forward.1} parent=5 // pred_check_branch
      %160 = sbr.rel (%p158) target = $region24
    $region23: #{ppeg_forward.1} parent=5 // pred_region
      // Predicated region
      $region25: #{ppeg_forward.1} parent=23 // pred_check
        %p161 = pneg %p43
      $region26: #{ppeg_forward.1} parent=23 // pred_check_branch
        %163 = sbr.rel (%p161) target = $region28
      $region27: #{ppeg_forward.1} parent=23 // pred_region
        %p164 = scmp.lt.s32.totalorder %s16, 1
        %s165 = scalar_select %p164, %s16, 1
        %p166 = scmp.lt.s32.totalorder %s17, 0
        %s167 = scalar_select %p166, %s17, 0
        %s168 = smul.addr %s165, 8
        %s169 = sadd.s32 %s167, %s168
        %s170 = smul.addr %s169, 8
        %s171 = scalar_lea.vmem %s0, %s170
      $region28: #{ppeg_forward.1} parent=23 // pred_fallthru
        _
    $region24: #{ppeg_forward.1} parent=5 // pred_fallthru
      _
    %p172 = scmp.le.s32.totalorder 1, %s9
    %p173 = scmp.lt.s32.totalorder %s9, 3
    %p174 = pnand %p172, %p173
    %p175 = pneg %p174
    // Predicated region
    $region29: #{ppeg_forward.1} parent=5 // pred_check
      _
    $region30: #{ppeg_forward.1} parent=5 // pred_check_branch
      %177 = sbr.rel (%p174) target = $region32
    $region31: #{ppeg_forward.1} parent=5 // pred_region
      %s178 = ssub.s32 %s9, 1
      %p179 = scmp.lt.s32.totalorder %s18, 1
      %s180 = scalar_select %p179, %s18, 1
      %p181 = scmp.lt.s32.totalorder %s19, 0
      %s182 = scalar_select %p181, %s19, 0
      %s183 = smul.addr %s180, 8
      %s184 = sadd.s32 %s182, %s183
      %s185 = smul.addr %s184, 8
      %s186 = scalar_lea.vmem %s0, %s185
      %p187 = pneg %p49
      %p188 = pneg %p46
      %p189 = scmp.lt.s32.totalorder %s19, 0
      %s190 = scalar_select %p189, %s19, 0
      %s191 = smul.addr %s190, 8
      %s192 = scalar_lea.vmem %s1, %s191
      %p193 = pneg %p75
      %p194 = pneg %p72
      %p195 = scmp.lt.s32.totalorder %s19, 0
      %s196 = scalar_select %p195, %s19, 0
      %s197 = scalar_lea.vmem %s2, %s196
      %p198 = pneg %p101
      %p199 = pneg %p98
      %p200 = pneg %p129
      %p201 = pneg %p126
      %p202 = scmp.lt.s32.totalorder %s18, 1
      %s203 = scalar_select %p202, %s18, 1
      %p204 = scmp.lt.s32.totalorder %s19, 0
      %s205 = scalar_select %p204, %s19, 0
      %s206 = smul.addr %s203, 8
      %s207 = sadd.s32 %s205, %s206
      %s208 = smul.addr %s207, 8
      %s209 = scalar_lea.vmem %s3, %s208
      %p210 = scmp.lt.s32.totalorder %s18, 1
      %s211 = scalar_select %p210, %s18, 1
      %p212 = scmp.lt.s32.totalorder %s19, 0
      %s213 = scalar_select %p212, %s19, 0
      %s214 = smul.addr %s211, 8
      %s215 = sadd.s32 %s213, %s214
      %s216 = smul.addr %s215, 8
      %s217 = scalar_lea.vmem %s0, %s216
      %p218 = scmp.lt.s32.totalorder %s19, 0
      %s219 = scalar_select %p218, %s19, 0
      %s220 = smul.addr %s219, 8
      %s221 = scalar_lea.vmem %s1, %s220
      %p222 = scmp.lt.s32.totalorder %s19, 0
      %s223 = scalar_select %p222, %s19, 0
      %s224 = scalar_lea.vmem %s2, %s223
      %p225 = scmp.lt.s32.totalorder %s18, 1
      %s226 = scalar_select %p225, %s18, 1
      %p227 = scmp.lt.s32.totalorder %s19, 0
      %s228 = scalar_select %p227, %s19, 0
      %s229 = smul.addr %s226, 8
      %s230 = sadd.s32 %s228, %s229
      %s231 = smul.addr %s230, 8
      %s232 = scalar_lea.vmem %s3, %s231
      %233 = vst [vmem:[#allocation2] sm:$0xff] 0.0
      %234 = vst [vmem:[#allocation2 + $0x8] sm:$0x3f] 0.0
      %235 = vst [vmem:[#allocation2 + $0x10] sm:$0xff] 0.0
      %236 = vst [vmem:[#allocation2 + $0x18] sm:$0x3f] 0.0
      %237 = vst [vmem:[#allocation2 + $0x20] sm:$0xff] 0.0
      %238 = vst [vmem:[#allocation2 + $0x28] sm:$0x3f] 0.0
      %s239 = scalar_lea.vmem [#allocation2], 176
      %240 = vst [vmem:[%s239] sm:$0xff] 0.0
      %241 = vst [vmem:[%s239 + $0x8] sm:$0x3f] 0.0
      %242 = vst [vmem:[%s239 + $0x10] sm:$0xff] 0.0
      %243 = vst [vmem:[%s239 + $0x18] sm:$0x3f] 0.0
      %244 = vst [vmem:[%s239 + $0x20] sm:$0xff] 0.0
      %245 = vst [vmem:[%s239 + $0x28] sm:$0x3f] 0.0
      %s246 = scalar_lea.vmem [#allocation2], 48
      %247 = vst [vmem:[%s246] sm:$0x7] 0.0
      %248 = vst [vmem:[%s246 + $0x10] sm:$0x7] 0.0
      %249 = vst [vmem:[%s246 + $0x20] sm:$0x7] 0.0
      %250 = vst [vmem:[%s246 + $0x30] sm:$0x7] 0.0
      %251 = vst [vmem:[%s246 + $0x40] sm:$0x7] 0.0
      %252 = vst [vmem:[%s246 + $0x50] sm:$0x7] 0.0
      %253 = vst [vmem:[%s246 + $0x60] sm:$0x7] 0.0
      %254 = vst [vmem:[%s246 + $0x70] sm:$0x7] 0.0
      %255 = vst [vmem:[%s246 + $0xb] sm:$0x7] 0.0
      %256 = vst [vmem:[%s246 + $0x1b] sm:$0x7] 0.0
      %257 = vst [vmem:[%s246 + $0x2b] sm:$0x7] 0.0
      %258 = vst [vmem:[%s246 + $0x3b] sm:$0x7] 0.0
      %259 = vst [vmem:[%s246 + $0x4b] sm:$0x7] 0.0
      %260 = vst [vmem:[%s246 + $0x5b] sm:$0x7] 0.0
      %261 = vst [vmem:[%s246 + $0x6b] sm:$0x7] 0.0
      %262 = vst [vmem:[%s246 + $0x7b] sm:$0x7] 0.0
      %v263 = vld [vmem:[%s217] sm:$0xff]
      %v264 = vld [vmem:[%s217 + $0x8] sm:$0xff]
      %v265 = vld [vmem:[%s217 + $0x10] sm:$0xff]
      %v266 = vld [vmem:[%s217 + $0x18] sm:$0xff]
      %v267 = vld [vmem:[%s217 + $0x20] sm:$0xff]
      %v268 = vld [vmem:[%s217 + $0x28] sm:$0xff]
      %v269 = vld [vmem:[%s217 + $0x30] sm:$0xff]
      %v270 = vld [vmem:[%s217 + $0x38] sm:$0xff]
      %271 = vst [vmem:[%s246 + $0x3] sm:$0xff] %v263
      %272 = vst [vmem:[%s246 + $0x13] sm:$0xff] %v264
      %273 = vst [vmem:[%s246 + $0x23] sm:$0xff] %v265
      %274 = vst [vmem:[%s246 + $0x33] sm:$0xff] %v266
      %275 = vst [vmem:[%s246 + $0x43] sm:$0xff] %v267
      %276 = vst [vmem:[%s246 + $0x53] sm:$0xff] %v268
      %277 = vst [vmem:[%s246 + $0x63] sm:$0xff] %v269
      %278 = vst [vmem:[%s246 + $0x73] sm:$0xff] %v270
      %v279 = vld [vmem:[%s221] sm:$0x1]
      %v280 = vld [vmem:[%s221 + $0x1] sm:$0x1]
      %v281 = vld [vmem:[%s221 + $0x2] sm:$0x1]
      %v282 = vld [vmem:[%s221 + $0x3] sm:$0x1]
      %v283 = vld [vmem:[%s221 + $0x4] sm:$0x1]
      %v284 = vld [vmem:[%s221 + $0x5] sm:$0x1]
      %v285 = vld [vmem:[%s221 + $0x6] sm:$0x1]
      %v286 = vld [vmem:[%s221 + $0x7] sm:$0x1]
      %v287 = vld [vmem:[%s221 + $0x8] sm:$0x1]
      %v288 = vld [vmem:[%s221 + $0x9] sm:$0x1]
      %v289 = vld [vmem:[%s221 + $0xa] sm:$0x1]
      %v290 = vld [vmem:[%s221 + $0xb] sm:$0x1]
      %v291 = vld [vmem:[%s221 + $0xc] sm:$0x1]
      %v292 = vld [vmem:[%s221 + $0xd] sm:$0x1]
      %v293 = vld [vmem:[%s221 + $0xe] sm:$0x1]
      %v294 = vld [vmem:[%s221 + $0xf] sm:$0x1]
      %v295 = vld [vmem:[%s221 + $0x10] sm:$0x1]
      %v296 = vld [vmem:[%s221 + $0x11] sm:$0x1]
      %v297 = vld [vmem:[%s221 + $0x12] sm:$0x1]
      %v298 = vld [vmem:[%s221 + $0x13] sm:$0x1]
      %v299 = vld [vmem:[%s221 + $0x14] sm:$0x1]
      %v300 = vld [vmem:[%s221 + $0x15] sm:$0x1]
      %v301 = vld [vmem:[%s221 + $0x16] sm:$0x1]
      %v302 = vld [vmem:[%s221 + $0x17] sm:$0x1]
      %v303 = vld [vmem:[%s221 + $0x18] sm:$0x1]
      %v304 = vld [vmem:[%s221 + $0x19] sm:$0x1]
      %v305 = vld [vmem:[%s221 + $0x1a] sm:$0x1]
      %v306 = vld [vmem:[%s221 + $0x1b] sm:$0x1]
      %v307 = vld [vmem:[%s221 + $0x1c] sm:$0x1]
      %v308 = vld [vmem:[%s221 + $0x1d] sm:$0x1]
      %v309 = vld [vmem:[%s221 + $0x1e] sm:$0x1]
      %v310 = vld [vmem:[%s221 + $0x1f] sm:$0x1]
      %v311 = vld [vmem:[%s221 + $0x20] sm:$0x1]
      %v312 = vld [vmem:[%s221 + $0x21] sm:$0x1]
      %v313 = vld [vmem:[%s221 + $0x22] sm:$0x1]
      %v314 = vld [vmem:[%s221 + $0x23] sm:$0x1]
      %v315 = vld [vmem:[%s221 + $0x24] sm:$0x1]
      %v316 = vld [vmem:[%s221 + $0x25] sm:$0x1]
      %v317 = vld [vmem:[%s221 + $0x26] sm:$0x1]
      %v318 = vld [vmem:[%s221 + $0x27] sm:$0x1]
      %v319 = vld [vmem:[%s221 + $0x28] sm:$0x1]
      %v320 = vld [vmem:[%s221 + $0x29] sm:$0x1]
      %v321 = vld [vmem:[%s221 + $0x2a] sm:$0x1]
      %v322 = vld [vmem:[%s221 + $0x2b] sm:$0x1]
      %v323 = vld [vmem:[%s221 + $0x2c] sm:$0x1]
      %v324 = vld [vmem:[%s221 + $0x2d] sm:$0x1]
      %v325 = vld [vmem:[%s221 + $0x2e] sm:$0x1]
      %v326 = vld [vmem:[%s221 + $0x2f] sm:$0x1]
      %v327 = vld [vmem:[%s221 + $0x30] sm:$0x1]
      %v328 = vld [vmem:[#allocation2] sm:$0xff]
      %v329 = vld [vmem:[#allocation2 + $0x10] sm:$0xff]
      %v330 = vld [vmem:[#allocation2 + $0x20] sm:$0xff]
      %v331 = vld [vmem:[#allocation2 + $0x30] sm:$0xff]
      %v332 = vld [vmem:[#allocation2 + $0x40] sm:$0xff]
      %v333 = vld [vmem:[#allocation2 + $0x50] sm:$0xff]
      %v334 = vld [vmem:[#allocation2 + $0x60] sm:$0xff]
      %v335 = vld [vmem:[#allocation2 + $0x70] sm:$0xff]
      %v336 = vperm.slane %v279, 0
      %v337 = vmul.f32 %v328, %v336
      %v338 = vmul.f32 %v329, %v336
      %v339 = vmul.f32 %v330, %v336
      %v340 = vmul.f32 %v331, %v336
      %v341 = vmul.f32 %v332, %v336
      %v342 = vmul.f32 %v333, %v336
      %v343 = vmul.f32 %v334, %v336
      %v344 = vmul.f32 %v335, %v336
      %v345 = vld [vmem:[#allocation2 + $0x1] sm:$0xff]
      %v346 = vld [vmem:[#allocation2 + $0x11] sm:$0xff]
      %v347 = vld [vmem:[#allocation2 + $0x21] sm:$0xff]
      %v348 = vld [vmem:[#allocation2 + $0x31] sm:$0xff]
      %v349 = vld [vmem:[#allocation2 + $0x41] sm:$0xff]
      %v350 = vld [vmem:[#allocation2 + $0x51] sm:$0xff]
      %v351 = vld [vmem:[#allocation2 + $0x61] sm:$0xff]
      %v352 = vld [vmem:[#allocation2 + $0x71] sm:$0xff]
      %v353 = vperm.slane %v280, 0
      %v354 = vmul.f32 %v345, %v353
      %v355 = vmul.f32 %v346, %v353
      %v356 = vmul.f32 %v347, %v353
      %v357 = vmul.f32 %v348, %v353
      %v358 = vmul.f32 %v349, %v353
      %v359 = vmul.f32 %v350, %v353
      %v360 = vmul.f32 %v351, %v353
      %v361 = vmul.f32 %v352, %v353
      %v362 = vld [vmem:[#allocation2 + $0x2] sm:$0xff]
      %v363 = vld [vmem:[#allocation2 + $0x12] sm:$0xff]
      %v364 = vld [vmem:[#allocation2 + $0x22] sm:$0xff]
      %v365 = vld [vmem:[#allocation2 + $0x32] sm:$0xff]
      %v366 = vld [vmem:[#allocation2 + $0x42] sm:$0xff]
      %v367 = vld [vmem:[#allocation2 + $0x52] sm:$0xff]
      %v368 = vld [vmem:[#allocation2 + $0x62] sm:$0xff]
      %v369 = vld [vmem:[#allocation2 + $0x72] sm:$0xff]
      %v370 = vperm.slane %v281, 0
      %v371 = vmul.f32 %v362, %v370
      %v372 = vmul.f32 %v363, %v370
      %v373 = vmul.f32 %v364, %v370
      %v374 = vmul.f32 %v365, %v370
      %v375 = vmul.f32 %v366, %v370
      %v376 = vmul.f32 %v367, %v370
      %v377 = vmul.f32 %v368, %v370
      %v378 = vmul.f32 %v369, %v370
      %v379 = vadd.f32 %v337, %v371
      %v380 = vadd.f32 %v338, %v372
      %v381 = vadd.f32 %v339, %v373
      %v382 = vadd.f32 %v340, %v374
      %v383 = vadd.f32 %v341, %v375
      %v384 = vadd.f32 %v342, %v376
      %v385 = vadd.f32 %v343, %v377
      %v386 = vadd.f32 %v344, %v378
      %v387 = vld [vmem:[#allocation2 + $0x3] sm:$0xff]
      %v388 = vld [vmem:[#allocation2 + $0x13] sm:$0xff]
      %v389 = vld [vmem:[#allocation2 + $0x23] sm:$0xff]
      %v390 = vld [vmem:[#allocation2 + $0x33] sm:$0xff]
      %v391 = vld [vmem:[#allocation2 + $0x43] sm:$0xff]
      %v392 = vld [vmem:[#allocation2 + $0x53] sm:$0xff]
      %v393 = vld [vmem:[#allocation2 + $0x63] sm:$0xff]
      %v394 = vld [vmem:[#allocation2 + $0x73] sm:$0xff]
      %v395 = vperm.slane %v282, 0
      %v396 = vmul.f32 %v387, %v395
      %v397 = vmul.f32 %v388, %v395
      %v398 = vmul.f32 %v389, %v395
      %v399 = vmul.f32 %v390, %v395
      %v400 = vmul.f32 %v391, %v395
      %v401 = vmul.f32 %v392, %v395
      %v402 = vmul.f32 %v393, %v395
      %v403 = vmul.f32 %v394, %v395
      %v404 = vadd.f32 %v354, %v396
      %v405 = vadd.f32 %v355, %v397
      %v406 = vadd.f32 %v356, %v398
      %v407 = vadd.f32 %v357, %v399
      %v408 = vadd.f32 %v358, %v400
      %v409 = vadd.f32 %v359, %v401
      %v410 = vadd.f32 %v360, %v402
      %v411 = vadd.f32 %v361, %v403
      %v412 = vld [vmem:[#allocation2 + $0x4] sm:$0xff]
      %v413 = vld [vmem:[#allocation2 + $0x14] sm:$0xff]
      %v414 = vld [vmem:[#allocation2 + $0x24] sm:$0xff]
      %v415 = vld [vmem:[#allocation2 + $0x34] sm:$0xff]
      %v416 = vld [vmem:[#allocation2 + $0x44] sm:$0xff]
      %v417 = vld [vmem:[#allocation2 + $0x54] sm:$0xff]
      %v418 = vld [vmem:[#allocation2 + $0x64] sm:$0xff]
      %v419 = vld [vmem:[#allocation2 + $0x74] sm:$0xff]
      %v420 = vperm.slane %v283, 0
      %v421 = vmul.f32 %v412, %v420
      %v422 = vmul.f32 %v413, %v420
      %v423 = vmul.f32 %v414, %v420
      %v424 = vmul.f32 %v415, %v420
      %v425 = vmul.f32 %v416, %v420
      %v426 = vmul.f32 %v417, %v420
      %v427 = vmul.f32 %v418, %v420
      %v428 = vmul.f32 %v419, %v420
      %v429 = vadd.f32 %v379, %v421
      %v430 = vadd.f32 %v380, %v422
      %v431 = vadd.f32 %v381, %v423
      %v432 = vadd.f32 %v382, %v424
      %v433 = vadd.f32 %v383, %v425
      %v434 = vadd.f32 %v384, %v426
      %v435 = vadd.f32 %v385, %v427
      %v436 = vadd.f32 %v386, %v428
      %v437 = vld [vmem:[#allocation2 + $0x5] sm:$0xff]
      %v438 = vld [vmem:[#allocation2 + $0x15] sm:$0xff]
      %v439 = vld [vmem:[#allocation2 + $0x25] sm:$0xff]
      %v440 = vld [vmem:[#allocation2 + $0x35] sm:$0xff]
      %v441 = vld [vmem:[#allocation2 + $0x45] sm:$0xff]
      %v442 = vld [vmem:[#allocation2 + $0x55] sm:$0xff]
      %v443 = vld [vmem:[#allocation2 + $0x65] sm:$0xff]
      %v444 = vld [vmem:[#allocation2 + $0x75] sm:$0xff]
      %v445 = vperm.slane %v284, 0
      %v446 = vmul.f32 %v437, %v445
      %v447 = vmul.f32 %v438, %v445
      %v448 = vmul.f32 %v439, %v445
      %v449 = vmul.f32 %v440, %v445
      %v450 = vmul.f32 %v441, %v445
      %v451 = vmul.f32 %v442, %v445
      %v452 = vmul.f32 %v443, %v445
      %v453 = vmul.f32 %v444, %v445
      %v454 = vadd.f32 %v404, %v446
      %v455 = vadd.f32 %v405, %v447
      %v456 = vadd.f32 %v406, %v448
      %v457 = vadd.f32 %v407, %v449
      %v458 = vadd.f32 %v408, %v450
      %v459 = vadd.f32 %v409, %v451
      %v460 = vadd.f32 %v410, %v452
      %v461 = vadd.f32 %v411, %v453
      %v462 = vld [vmem:[#allocation2 + $0x6] sm:$0xff]
      %v463 = vld [vmem:[#allocation2 + $0x16] sm:$0xff]
      %v464 = vld [vmem:[#allocation2 + $0x26] sm:$0xff]
      %v465 = vld [vmem:[#allocation2 + $0x36] sm:$0xff]
      %v466 = vld [vmem:[#allocation2 + $0x46] sm:$0xff]
      %v467 = vld [vmem:[#allocation2 + $0x56] sm:$0xff]
      %v468 = vld [vmem:[#allocation2 + $0x66] sm:$0xff]
      %v469 = vld [vmem:[#allocation2 + $0x76] sm:$0xff]
      %v470 = vperm.slane %v285, 0
      %v471 = vmul.f32 %v462, %v470
      %v472 = vmul.f32 %v463, %v470
      %v473 = vmul.f32 %v464, %v470
      %v474 = vmul.f32 %v465, %v470
      %v475 = vmul.f32 %v466, %v470
      %v476 = vmul.f32 %v467, %v470
      %v477 = vmul.f32 %v468, %v470
      %v478 = vmul.f32 %v469, %v470
      %v479 = vadd.f32 %v429, %v471
      %v480 = vadd.f32 %v430, %v472
      %v481 = vadd.f32 %v431, %v473
      %v482 = vadd.f32 %v432, %v474
      %v483 = vadd.f32 %v433, %v475
      %v484 = vadd.f32 %v434, %v476
      %v485 = vadd.f32 %v435, %v477
      %v486 = vadd.f32 %v436, %v478
      %s487 = scalar_lea.vmem [#allocation2], 16
      %v488 = vld [vmem:[%s487] sm:$0xff]
      %v489 = vld [vmem:[%s487 + $0x10] sm:$0xff]
      %v490 = vld [vmem:[%s487 + $0x20] sm:$0xff]
      %v491 = vld [vmem:[%s487 + $0x30] sm:$0xff]
      %v492 = vld [vmem:[%s487 + $0x40] sm:$0xff]
      %v493 = vld [vmem:[%s487 + $0x50] sm:$0xff]
      %v494 = vld [vmem:[%s487 + $0x60] sm:$0xff]
      %v495 = vld [vmem:[%s487 + $0x70] sm:$0xff]
      %v496 = vperm.slane %v286, 0
      %v497 = vmul.f32 %v488, %v496
      %v498 = vmul.f32 %v489, %v496
      %v499 = vmul.f32 %v490, %v496
      %v500 = vmul.f32 %v491, %v496
      %v501 = vmul.f32 %v492, %v496
      %v502 = vmul.f32 %v493, %v496
      %v503 = vmul.f32 %v494, %v496
      %v504 = vmul.f32 %v495, %v496
      %v505 = vadd.f32 %v454, %v497
      %v506 = vadd.f32 %v455, %v498
      %v507 = vadd.f32 %v456, %v499
      %v508 = vadd.f32 %v457, %v500
      %v509 = vadd.f32 %v458, %v501
      %v510 = vadd.f32 %v459, %v502
      %v511 = vadd.f32 %v460, %v503
      %v512 = vadd.f32 %v461, %v504
      %v513 = vld [vmem:[%s487 + $0x1] sm:$0xff]
      %v514 = vld [vmem:[%s487 + $0x11] sm:$0xff]
      %v515 = vld [vmem:[%s487 + $0x21] sm:$0xff]
      %v516 = vld [vmem:[%s487 + $0x31] sm:$0xff]
      %v517 = vld [vmem:[%s487 + $0x41] sm:$0xff]
      %v518 = vld [vmem:[%s487 + $0x51] sm:$0xff]
      %v519 = vld [vmem:[%s487 + $0x61] sm:$0xff]
      %v520 = vld [vmem:[%s487 + $0x71] sm:$0xff]
      %v521 = vperm.slane %v287, 0
      %v522 = vmul.f32 %v513, %v521
      %v523 = vmul.f32 %v514, %v521
      %v524 = vmul.f32 %v515, %v521
      %v525 = vmul.f32 %v516, %v521
      %v526 = vmul.f32 %v517, %v521
      %v527 = vmul.f32 %v518, %v521
      %v528 = vmul.f32 %v519, %v521
      %v529 = vmul.f32 %v520, %v521
      %v530 = vadd.f32 %v479, %v522
      %v531 = vadd.f32 %v480, %v523
      %v532 = vadd.f32 %v481, %v524
      %v533 = vadd.f32 %v482, %v525
      %v534 = vadd.f32 %v483, %v526
      %v535 = vadd.f32 %v484, %v527
      %v536 = vadd.f32 %v485, %v528
      %v537 = vadd.f32 %v486, %v529
      %v538 = vld [vmem:[%s487 + $0x2] sm:$0xff]
      %v539 = vld [vmem:[%s487 + $0x12] sm:$0xff]
      %v540 = vld [vmem:[%s487 + $0x22] sm:$0xff]
      %v541 = vld [vmem:[%s487 + $0x32] sm:$0xff]
      %v542 = vld [vmem:[%s487 + $0x42] sm:$0xff]
      %v543 = vld [vmem:[%s487 + $0x52] sm:$0xff]
      %v544 = vld [vmem:[%s487 + $0x62] sm:$0xff]
      %v545 = vld [vmem:[%s487 + $0x72] sm:$0xff]
      %v546 = vperm.slane %v288, 0
      %v547 = vmul.f32 %v538, %v546
      %v548 = vmul.f32 %v539, %v546
      %v549 = vmul.f32 %v540, %v546
      %v550 = vmul.f32 %v541, %v546
      %v551 = vmul.f32 %v542, %v546
      %v552 = vmul.f32 %v543, %v546
      %v553 = vmul.f32 %v544, %v546
      %v554 = vmul.f32 %v545, %v546
      %v555 = vadd.f32 %v505, %v547
      %v556 = vadd.f32 %v506, %v548
      %v557 = vadd.f32 %v507, %v549
      %v558 = vadd.f32 %v508, %v550
      %v559 = vadd.f32 %v509, %v551
      %v560 = vadd.f32 %v510, %v552
      %v561 = vadd.f32 %v511, %v553
      %v562 = vadd.f32 %v512, %v554
      %v563 = vld [vmem:[%s487 + $0x3] sm:$0xff]
      %v564 = vld [vmem:[%s487 + $0x13] sm:$0xff]
      %v565 = vld [vmem:[%s487 + $0x23] sm:$0xff]
      %v566 = vld [vmem:[%s487 + $0x33] sm:$0xff]
      %v567 = vld [vmem:[%s487 + $0x43] sm:$0xff]
      %v568 = vld [vmem:[%s487 + $0x53] sm:$0xff]
      %v569 = vld [vmem:[%s487 + $0x63] sm:$0xff]
      %v570 = vld [vmem:[%s487 + $0x73] sm:$0xff]
      %v571 = vperm.slane %v289, 0
      %v572 = vmul.f32 %v563, %v571
      %v573 = vmul.f32 %v564, %v571
      %v574 = vmul.f32 %v565, %v571
      %v575 = vmul.f32 %v566, %v571
      %v576 = vmul.f32 %v567, %v571
      %v577 = vmul.f32 %v568, %v571
      %v578 = vmul.f32 %v569, %v571
      %v579 = vmul.f32 %v570, %v571
      %v580 = vadd.f32 %v530, %v572
      %v581 = vadd.f32 %v531, %v573
      %v582 = vadd.f32 %v532, %v574
      %v583 = vadd.f32 %v533, %v575
      %v584 = vadd.f32 %v534, %v576
      %v585 = vadd.f32 %v535, %v577
      %v586 = vadd.f32 %v536, %v578
      %v587 = vadd.f32 %v537, %v579
      %v588 = vld [vmem:[%s487 + $0x4] sm:$0xff]
      %v589 = vld [vmem:[%s487 + $0x14] sm:$0xff]
      %v590 = vld [vmem:[%s487 + $0x24] sm:$0xff]
      %v591 = vld [vmem:[%s487 + $0x34] sm:$0xff]
      %v592 = vld [vmem:[%s487 + $0x44] sm:$0xff]
      %v593 = vld [vmem:[%s487 + $0x54] sm:$0xff]
      %v594 = vld [vmem:[%s487 + $0x64] sm:$0xff]
      %v595 = vld [vmem:[%s487 + $0x74] sm:$0xff]
      %v596 = vperm.slane %v290, 0
      %v597 = vmul.f32 %v588, %v596
      %v598 = vmul.f32 %v589, %v596
      %v599 = vmul.f32 %v590, %v596
      %v600 = vmul.f32 %v591, %v596
      %v601 = vmul.f32 %v592, %v596
      %v602 = vmul.f32 %v593, %v596
      %v603 = vmul.f32 %v594, %v596
      %v604 = vmul.f32 %v595, %v596
      %v605 = vadd.f32 %v555, %v597
      %v606 = vadd.f32 %v556, %v598
      %v607 = vadd.f32 %v557, %v599
      %v608 = vadd.f32 %v558, %v600
      %v609 = vadd.f32 %v559, %v601
      %v610 = vadd.f32 %v560, %v602
      %v611 = vadd.f32 %v561, %v603
      %v612 = vadd.f32 %v562, %v604
      %v613 = vld [vmem:[%s487 + $0x5] sm:$0xff]
      %v614 = vld [vmem:[%s487 + $0x15] sm:$0xff]
      %v615 = vld [vmem:[%s487 + $0x25] sm:$0xff]
      %v616 = vld [vmem:[%s487 + $0x35] sm:$0xff]
      %v617 = vld [vmem:[%s487 + $0x45] sm:$0xff]
      %v618 = vld [vmem:[%s487 + $0x55] sm:$0xff]
      %v619 = vld [vmem:[%s487 + $0x65] sm:$0xff]
      %v620 = vld [vmem:[%s487 + $0x75] sm:$0xff]
      %v621 = vperm.slane %v291, 0
      %v622 = vmul.f32 %v613, %v621
      %v623 = vmul.f32 %v614, %v621
      %v624 = vmul.f32 %v615, %v621
      %v625 = vmul.f32 %v616, %v621
      %v626 = vmul.f32 %v617, %v621
      %v627 = vmul.f32 %v618, %v621
      %v628 = vmul.f32 %v619, %v621
      %v629 = vmul.f32 %v620, %v621
      %v630 = vadd.f32 %v580, %v622
      %v631 = vadd.f32 %v581, %v623
      %v632 = vadd.f32 %v582, %v624
      %v633 = vadd.f32 %v583, %v625
      %v634 = vadd.f32 %v584, %v626
      %v635 = vadd.f32 %v585, %v627
      %v636 = vadd.f32 %v586, %v628
      %v637 = vadd.f32 %v587, %v629
      %v638 = vld [vmem:[%s487 + $0x6] sm:$0xff]
      %v639 = vld [vmem:[%s487 + $0x16] sm:$0xff]
      %v640 = vld [vmem:[%s487 + $0x26] sm:$0xff]
      %v641 = vld [vmem:[%s487 + $0x36] sm:$0xff]
      %v642 = vld [vmem:[%s487 + $0x46] sm:$0xff]
      %v643 = vld [vmem:[%s487 + $0x56] sm:$0xff]
      %v644 = vld [vmem:[%s487 + $0x66] sm:$0xff]
      %v645 = vld [vmem:[%s487 + $0x76] sm:$0xff]
      %v646 = vperm.slane %v292, 0
      %v647 = vmul.f32 %v638, %v646
      %v648 = vmul.f32 %v639, %v646
      %v649 = vmul.f32 %v640, %v646
      %v650 = vmul.f32 %v641, %v646
      %v651 = vmul.f32 %v642, %v646
      %v652 = vmul.f32 %v643, %v646
      %v653 = vmul.f32 %v644, %v646
      %v654 = vmul.f32 %v645, %v646
      %v655 = vadd.f32 %v605, %v647
      %v656 = vadd.f32 %v606, %v648
      %v657 = vadd.f32 %v607, %v649
      %v658 = vadd.f32 %v608, %v650
      %v659 = vadd.f32 %v609, %v651
      %v660 = vadd.f32 %v610, %v652
      %v661 = vadd.f32 %v611, %v653
      %v662 = vadd.f32 %v612, %v654
      %s663 = scalar_lea.vmem [#allocation2], 32
      %v664 = vld [vmem:[%s663] sm:$0xff]
      %v665 = vld [vmem:[%s663 + $0x10] sm:$0xff]
      %v666 = vld [vmem:[%s663 + $0x20] sm:$0xff]
      %v667 = vld [vmem:[%s663 + $0x30] sm:$0xff]
      %v668 = vld [vmem:[%s663 + $0x40] sm:$0xff]
      %v669 = vld [vmem:[%s663 + $0x50] sm:$0xff]
      %v670 = vld [vmem:[%s663 + $0x60] sm:$0xff]
      %v671 = vld [vmem:[%s663 + $0x70] sm:$0xff]
      %v672 = vperm.slane %v293, 0
      %v673 = vmul.f32 %v664, %v672
      %v674 = vmul.f32 %v665, %v672
      %v675 = vmul.f32 %v666, %v672
      %v676 = vmul.f32 %v667, %v672
      %v677 = vmul.f32 %v668, %v672
      %v678 = vmul.f32 %v669, %v672
      %v679 = vmul.f32 %v670, %v672
      %v680 = vmul.f32 %v671, %v672
      %v681 = vadd.f32 %v630, %v673
      %v682 = vadd.f32 %v631, %v674
      %v683 = vadd.f32 %v632, %v675
      %v684 = vadd.f32 %v633, %v676
      %v685 = vadd.f32 %v634, %v677
      %v686 = vadd.f32 %v635, %v678
      %v687 = vadd.f32 %v636, %v679
      %v688 = vadd.f32 %v637, %v680
      %v689 = vld [vmem:[%s663 + $0x1] sm:$0xff]
      %v690 = vld [vmem:[%s663 + $0x11] sm:$0xff]
      %v691 = vld [vmem:[%s663 + $0x21] sm:$0xff]
      %v692 = vld [vmem:[%s663 + $0x31] sm:$0xff]
      %v693 = vld [vmem:[%s663 + $0x41] sm:$0xff]
      %v694 = vld [vmem:[%s663 + $0x51] sm:$0xff]
      %v695 = vld [vmem:[%s663 + $0x61] sm:$0xff]
      %v696 = vld [vmem:[%s663 + $0x71] sm:$0xff]
      %v697 = vperm.slane %v294, 0
      %v698 = vmul.f32 %v689, %v697
      %v699 = vmul.f32 %v690, %v697
      %v700 = vmul.f32 %v691, %v697
      %v701 = vmul.f32 %v692, %v697
      %v702 = vmul.f32 %v693, %v697
      %v703 = vmul.f32 %v694, %v697
      %v704 = vmul.f32 %v695, %v697
      %v705 = vmul.f32 %v696, %v697
      %v706 = vadd.f32 %v655, %v698
      %v707 = vadd.f32 %v656, %v699
      %v708 = vadd.f32 %v657, %v700
      %v709 = vadd.f32 %v658, %v701
      %v710 = vadd.f32 %v659, %v702
      %v711 = vadd.f32 %v660, %v703
      %v712 = vadd.f32 %v661, %v704
      %v713 = vadd.f32 %v662, %v705
      %v714 = vld [vmem:[%s663 + $0x2] sm:$0xff]
      %v715 = vld [vmem:[%s663 + $0x12] sm:$0xff]
      %v716 = vld [vmem:[%s663 + $0x22] sm:$0xff]
      %v717 = vld [vmem:[%s663 + $0x32] sm:$0xff]
      %v718 = vld [vmem:[%s663 + $0x42] sm:$0xff]
      %v719 = vld [vmem:[%s663 + $0x52] sm:$0xff]
      %v720 = vld [vmem:[%s663 + $0x62] sm:$0xff]
      %v721 = vld [vmem:[%s663 + $0x72] sm:$0xff]
      %v722 = vperm.slane %v295, 0
      %v723 = vmul.f32 %v714, %v722
      %v724 = vmul.f32 %v715, %v722
      %v725 = vmul.f32 %v716, %v722
      %v726 = vmul.f32 %v717, %v722
      %v727 = vmul.f32 %v718, %v722
      %v728 = vmul.f32 %v719, %v722
      %v729 = vmul.f32 %v720, %v722
      %v730 = vmul.f32 %v721, %v722
      %v731 = vadd.f32 %v681, %v723
      %v732 = vadd.f32 %v682, %v724
      %v733 = vadd.f32 %v683, %v725
      %v734 = vadd.f32 %v684, %v726
      %v735 = vadd.f32 %v685, %v727
      %v736 = vadd.f32 %v686, %v728
      %v737 = vadd.f32 %v687, %v729
      %v738 = vadd.f32 %v688, %v730
      %v739 = vld [vmem:[%s663 + $0x3] sm:$0xff]
      %v740 = vld [vmem:[%s663 + $0x13] sm:$0xff]
      %v741 = vld [vmem:[%s663 + $0x23] sm:$0xff]
      %v742 = vld [vmem:[%s663 + $0x33] sm:$0xff]
      %v743 = vld [vmem:[%s663 + $0x43] sm:$0xff]
      %v744 = vld [vmem:[%s663 + $0x53] sm:$0xff]
      %v745 = vld [vmem:[%s663 + $0x63] sm:$0xff]
      %v746 = vld [vmem:[%s663 + $0x73] sm:$0xff]
      %v747 = vperm.slane %v296, 0
      %v748 = vmul.f32 %v739, %v747
      %v749 = vmul.f32 %v740, %v747
      %v750 = vmul.f32 %v741, %v747
      %v751 = vmul.f32 %v742, %v747
      %v752 = vmul.f32 %v743, %v747
      %v753 = vmul.f32 %v744, %v747
      %v754 = vmul.f32 %v745, %v747
      %v755 = vmul.f32 %v746, %v747
      %v756 = vadd.f32 %v706, %v748
      %v757 = vadd.f32 %v707, %v749
      %v758 = vadd.f32 %v708, %v750
      %v759 = vadd.f32 %v709, %v751
      %v760 = vadd.f32 %v710, %v752
      %v761 = vadd.f32 %v711, %v753
      %v762 = vadd.f32 %v712, %v754
      %v763 = vadd.f32 %v713, %v755
      %v764 = vld [vmem:[%s663 + $0x4] sm:$0xff]
      %v765 = vld [vmem:[%s663 + $0x14] sm:$0xff]
      %v766 = vld [vmem:[%s663 + $0x24] sm:$0xff]
      %v767 = vld [vmem:[%s663 + $0x34] sm:$0xff]
      %v768 = vld [vmem:[%s663 + $0x44] sm:$0xff]
      %v769 = vld [vmem:[%s663 + $0x54] sm:$0xff]
      %v770 = vld [vmem:[%s663 + $0x64] sm:$0xff]
      %v771 = vld [vmem:[%s663 + $0x74] sm:$0xff]
      %v772 = vperm.slane %v297, 0
      %v773 = vmul.f32 %v764, %v772
      %v774 = vmul.f32 %v765, %v772
      %v775 = vmul.f32 %v766, %v772
      %v776 = vmul.f32 %v767, %v772
      %v777 = vmul.f32 %v768, %v772
      %v778 = vmul.f32 %v769, %v772
      %v779 = vmul.f32 %v770, %v772
      %v780 = vmul.f32 %v771, %v772
      %v781 = vadd.f32 %v731, %v773
      %v782 = vadd.f32 %v732, %v774
      %v783 = vadd.f32 %v733, %v775
      %v784 = vadd.f32 %v734, %v776
      %v785 = vadd.f32 %v735, %v777
      %v786 = vadd.f32 %v736, %v778
      %v787 = vadd.f32 %v737, %v779
      %v788 = vadd.f32 %v738, %v780
      %v789 = vld [vmem:[%s663 + $0x5] sm:$0xff]
      %v790 = vld [vmem:[%s663 + $0x15] sm:$0xff]
      %v791 = vld [vmem:[%s663 + $0x25] sm:$0xff]
      %v792 = vld [vmem:[%s663 + $0x35] sm:$0xff]
      %v793 = vld [vmem:[%s663 + $0x45] sm:$0xff]
      %v794 = vld [vmem:[%s663 + $0x55] sm:$0xff]
      %v795 = vld [vmem:[%s663 + $0x65] sm:$0xff]
      %v796 = vld [vmem:[%s663 + $0x75] sm:$0xff]
      %v797 = vperm.slane %v298, 0
      %v798 = vmul.f32 %v789, %v797
      %v799 = vmul.f32 %v790, %v797
      %v800 = vmul.f32 %v791, %v797
      %v801 = vmul.f32 %v792, %v797
      %v802 = vmul.f32 %v793, %v797
      %v803 = vmul.f32 %v794, %v797
      %v804 = vmul.f32 %v795, %v797
      %v805 = vmul.f32 %v796, %v797
      %v806 = vadd.f32 %v756, %v798
      %v807 = vadd.f32 %v757, %v799
      %v808 = vadd.f32 %v758, %v800
      %v809 = vadd.f32 %v759, %v801
      %v810 = vadd.f32 %v760, %v802
      %v811 = vadd.f32 %v761, %v803
      %v812 = vadd.f32 %v762, %v804
      %v813 = vadd.f32 %v763, %v805
      %v814 = vld [vmem:[%s663 + $0x6] sm:$0xff]
      %v815 = vld [vmem:[%s663 + $0x16] sm:$0xff]
      %v816 = vld [vmem:[%s663 + $0x26] sm:$0xff]
      %v817 = vld [vmem:[%s663 + $0x36] sm:$0xff]
      %v818 = vld [vmem:[%s663 + $0x46] sm:$0xff]
      %v819 = vld [vmem:[%s663 + $0x56] sm:$0xff]
      %v820 = vld [vmem:[%s663 + $0x66] sm:$0xff]
      %v821 = vld [vmem:[%s663 + $0x76] sm:$0xff]
      %v822 = vperm.slane %v299, 0
      %v823 = vmul.f32 %v814, %v822
      %v824 = vmul.f32 %v815, %v822
      %v825 = vmul.f32 %v816, %v822
      %v826 = vmul.f32 %v817, %v822
      %v827 = vmul.f32 %v818, %v822
      %v828 = vmul.f32 %v819, %v822
      %v829 = vmul.f32 %v820, %v822
      %v830 = vmul.f32 %v821, %v822
      %v831 = vadd.f32 %v781, %v823
      %v832 = vadd.f32 %v782, %v824
      %v833 = vadd.f32 %v783, %v825
      %v834 = vadd.f32 %v784, %v826
      %v835 = vadd.f32 %v785, %v827
      %v836 = vadd.f32 %v786, %v828
      %v837 = vadd.f32 %v787, %v829
      %v838 = vadd.f32 %v788, %v830
      %v839 = vld [vmem:[%s246] sm:$0xff]
      %v840 = vld [vmem:[%s246 + $0x10] sm:$0xff]
      %v841 = vld [vmem:[%s246 + $0x20] sm:$0xff]
      %v842 = vld [vmem:[%s246 + $0x30] sm:$0xff]
      %v843 = vld [vmem:[%s246 + $0x40] sm:$0xff]
      %v844 = vld [vmem:[%s246 + $0x50] sm:$0xff]
      %v845 = vld [vmem:[%s246 + $0x60] sm:$0xff]
      %v846 = vld [vmem:[%s246 + $0x70] sm:$0xff]
      %v847 = vperm.slane %v300, 0
      %v848 = vmul.f32 %v839, %v847
      %v849 = vmul.f32 %v840, %v847
      %v850 = vmul.f32 %v841, %v847
      %v851 = vmul.f32 %v842, %v847
      %v852 = vmul.f32 %v843, %v847
      %v853 = vmul.f32 %v844, %v847
      %v854 = vmul.f32 %v845, %v847
      %v855 = vmul.f32 %v846, %v847
      %v856 = vadd.f32 %v806, %v848
      %v857 = vadd.f32 %v807, %v849
      %v858 = vadd.f32 %v808, %v850
      %v859 = vadd.f32 %v809, %v851
      %v860 = vadd.f32 %v810, %v852
      %v861 = vadd.f32 %v811, %v853
      %v862 = vadd.f32 %v812, %v854
      %v863 = vadd.f32 %v813, %v855
      %v864 = vld [vmem:[%s246 + $0x1] sm:$0xff]
      %v865 = vld [vmem:[%s246 + $0x11] sm:$0xff]
      %v866 = vld [vmem:[%s246 + $0x21] sm:$0xff]
      %v867 = vld [vmem:[%s246 + $0x31] sm:$0xff]
      %v868 = vld [vmem:[%s246 + $0x41] sm:$0xff]
      %v869 = vld [vmem:[%s246 + $0x51] sm:$0xff]
      %v870 = vld [vmem:[%s246 + $0x61] sm:$0xff]
      %v871 = vld [vmem:[%s246 + $0x71] sm:$0xff]
      %v872 = vperm.slane %v301, 0
      %v873 = vmul.f32 %v864, %v872
      %v874 = vmul.f32 %v865, %v872
      %v875 = vmul.f32 %v866, %v872
      %v876 = vmul.f32 %v867, %v872
      %v877 = vmul.f32 %v868, %v872
      %v878 = vmul.f32 %v869, %v872
      %v879 = vmul.f32 %v870, %v872
      %v880 = vmul.f32 %v871, %v872
      %v881 = vadd.f32 %v831, %v873
      %v882 = vadd.f32 %v832, %v874
      %v883 = vadd.f32 %v833, %v875
      %v884 = vadd.f32 %v834, %v876
      %v885 = vadd.f32 %v835, %v877
      %v886 = vadd.f32 %v836, %v878
      %v887 = vadd.f32 %v837, %v879
      %v888 = vadd.f32 %v838, %v880
      %v889 = vld [vmem:[%s246 + $0x2] sm:$0xff]
      %v890 = vld [vmem:[%s246 + $0x12] sm:$0xff]
      %v891 = vld [vmem:[%s246 + $0x22] sm:$0xff]
      %v892 = vld [vmem:[%s246 + $0x32] sm:$0xff]
      %v893 = vld [vmem:[%s246 + $0x42] sm:$0xff]
      %v894 = vld [vmem:[%s246 + $0x52] sm:$0xff]
      %v895 = vld [vmem:[%s246 + $0x62] sm:$0xff]
      %v896 = vld [vmem:[%s246 + $0x72] sm:$0xff]
      %v897 = vperm.slane %v302, 0
      %v898 = vmul.f32 %v889, %v897
      %v899 = vmul.f32 %v890, %v897
      %v900 = vmul.f32 %v891, %v897
      %v901 = vmul.f32 %v892, %v897
      %v902 = vmul.f32 %v893, %v897
      %v903 = vmul.f32 %v894, %v897
      %v904 = vmul.f32 %v895, %v897
      %v905 = vmul.f32 %v896, %v897
      %v906 = vadd.f32 %v856, %v898
      %v907 = vadd.f32 %v857, %v899
      %v908 = vadd.f32 %v858, %v900
      %v909 = vadd.f32 %v859, %v901
      %v910 = vadd.f32 %v860, %v902
      %v911 = vadd.f32 %v861, %v903
      %v912 = vadd.f32 %v862, %v904
      %v913 = vadd.f32 %v863, %v905
      %v914 = vld [vmem:[%s246 + $0x3] sm:$0xff]
      %v915 = vld [vmem:[%s246 + $0x13] sm:$0xff]
      %v916 = vld [vmem:[%s246 + $0x23] sm:$0xff]
      %v917 = vld [vmem:[%s246 + $0x33] sm:$0xff]
      %v918 = vld [vmem:[%s246 + $0x43] sm:$0xff]
      %v919 = vld [vmem:[%s246 + $0x53] sm:$0xff]
      %v920 = vld [vmem:[%s246 + $0x63] sm:$0xff]
      %v921 = vld [vmem:[%s246 + $0x73] sm:$0xff]
      %v922 = vperm.slane %v303, 0
      %v923 = vmul.f32 %v914, %v922
      %v924 = vmul.f32 %v915, %v922
      %v925 = vmul.f32 %v916, %v922
      %v926 = vmul.f32 %v917, %v922
      %v927 = vmul.f32 %v918, %v922
      %v928 = vmul.f32 %v919, %v922
      %v929 = vmul.f32 %v920, %v922
      %v930 = vmul.f32 %v921, %v922
      %v931 = vadd.f32 %v881, %v923
      %v932 = vadd.f32 %v882, %v924
      %v933 = vadd.f32 %v883, %v925
      %v934 = vadd.f32 %v884, %v926
      %v935 = vadd.f32 %v885, %v927
      %v936 = vadd.f32 %v886, %v928
      %v937 = vadd.f32 %v887, %v929
      %v938 = vadd.f32 %v888, %v930
      %v939 = vld [vmem:[%s246 + $0x4] sm:$0xff]
      %v940 = vld [vmem:[%s246 + $0x14] sm:$0xff]
      %v941 = vld [vmem:[%s246 + $0x24] sm:$0xff]
      %v942 = vld [vmem:[%s246 + $0x34] sm:$0xff]
      %v943 = vld [vmem:[%s246 + $0x44] sm:$0xff]
      %v944 = vld [vmem:[%s246 + $0x54] sm:$0xff]
      %v945 = vld [vmem:[%s246 + $0x64] sm:$0xff]
      %v946 = vld [vmem:[%s246 + $0x74] sm:$0xff]
      %v947 = vperm.slane %v304, 0
      %v948 = vmul.f32 %v939, %v947
      %v949 = vmul.f32 %v940, %v947
      %v950 = vmul.f32 %v941, %v947
      %v951 = vmul.f32 %v942, %v947
      %v952 = vmul.f32 %v943, %v947
      %v953 = vmul.f32 %v944, %v947
      %v954 = vmul.f32 %v945, %v947
      %v955 = vmul.f32 %v946, %v947
      %v956 = vadd.f32 %v906, %v948
      %v957 = vadd.f32 %v907, %v949
      %v958 = vadd.f32 %v908, %v950
      %v959 = vadd.f32 %v909, %v951
      %v960 = vadd.f32 %v910, %v952
      %v961 = vadd.f32 %v911, %v953
      %v962 = vadd.f32 %v912, %v954
      %v963 = vadd.f32 %v913, %v955
      %v964 = vld [vmem:[%s246 + $0x5] sm:$0xff]
      %v965 = vld [vmem:[%s246 + $0x15] sm:$0xff]
      %v966 = vld [vmem:[%s246 + $0x25] sm:$0xff]
      %v967 = vld [vmem:[%s246 + $0x35] sm:$0xff]
      %v968 = vld [vmem:[%s246 + $0x45] sm:$0xff]
      %v969 = vld [vmem:[%s246 + $0x55] sm:$0xff]
      %v970 = vld [vmem:[%s246 + $0x65] sm:$0xff]
      %v971 = vld [vmem:[%s246 + $0x75] sm:$0xff]
      %v972 = vperm.slane %v305, 0
      %v973 = vmul.f32 %v964, %v972
      %v974 = vmul.f32 %v965, %v972
      %v975 = vmul.f32 %v966, %v972
      %v976 = vmul.f32 %v967, %v972
      %v977 = vmul.f32 %v968, %v972
      %v978 = vmul.f32 %v969, %v972
      %v979 = vmul.f32 %v970, %v972
      %v980 = vmul.f32 %v971, %v972
      %v981 = vadd.f32 %v931, %v973
      %v982 = vadd.f32 %v932, %v974
      %v983 = vadd.f32 %v933, %v975
      %v984 = vadd.f32 %v934, %v976
      %v985 = vadd.f32 %v935, %v977
      %v986 = vadd.f32 %v936, %v978
      %v987 = vadd.f32 %v937, %v979
      %v988 = vadd.f32 %v938, %v980
      %v989 = vld [vmem:[%s246 + $0x6] sm:$0xff]
      %v990 = vld [vmem:[%s246 + $0x16] sm:$0xff]
      %v991 = vld [vmem:[%s246 + $0x26] sm:$0xff]
      %v992 = vld [vmem:[%s246 + $0x36] sm:$0xff]
      %v993 = vld [vmem:[%s246 + $0x46] sm:$0xff]
      %v994 = vld [vmem:[%s246 + $0x56] sm:$0xff]
      %v995 = vld [vmem:[%s246 + $0x66] sm:$0xff]
      %v996 = vld [vmem:[%s246 + $0x76] sm:$0xff]
      %v997 = vperm.slane %v306, 0
      %v998 = vmul.f32 %v989, %v997
      %v999 = vmul.f32 %v990, %v997
      %v1000 = vmul.f32 %v991, %v997
      %v1001 = vmul.f32 %v992, %v997
      %v1002 = vmul.f32 %v993, %v997
      %v1003 = vmul.f32 %v994, %v997
      %v1004 = vmul.f32 %v995, %v997
      %v1005 = vmul.f32 %v996, %v997
      %v1006 = vadd.f32 %v956, %v998
      %v1007 = vadd.f32 %v957, %v999
      %v1008 = vadd.f32 %v958, %v1000
      %v1009 = vadd.f32 %v959, %v1001
      %v1010 = vadd.f32 %v960, %v1002
      %v1011 = vadd.f32 %v961, %v1003
      %v1012 = vadd.f32 %v962, %v1004
      %v1013 = vadd.f32 %v963, %v1005
      %s1014 = scalar_lea.vmem [#allocation2], 64
      %v1015 = vld [vmem:[%s1014] sm:$0xff]
      %v1016 = vld [vmem:[%s1014 + $0x10] sm:$0xff]
      %v1017 = vld [vmem:[%s1014 + $0x20] sm:$0xff]
      %v1018 = vld [vmem:[%s1014 + $0x30] sm:$0xff]
      %v1019 = vld [vmem:[%s1014 + $0x40] sm:$0xff]
      %v1020 = vld [vmem:[%s1014 + $0x50] sm:$0xff]
      %v1021 = vld [vmem:[%s1014 + $0x60] sm:$0xff]
      %v1022 = vld [vmem:[%s1014 + $0x70] sm:$0xff]
      %v1023 = vperm.slane %v307, 0
      %v1024 = vmul.f32 %v1015, %v1023
      %v1025 = vmul.f32 %v1016, %v1023
      %v1026 = vmul.f32 %v1017, %v1023
      %v1027 = vmul.f32 %v1018, %v1023
      %v1028 = vmul.f32 %v1019, %v1023
      %v1029 = vmul.f32 %v1020, %v1023
      %v1030 = vmul.f32 %v1021, %v1023
      %v1031 = vmul.f32 %v1022, %v1023
      %v1032 = vadd.f32 %v981, %v1024
      %v1033 = vadd.f32 %v982, %v1025
      %v1034 = vadd.f32 %v983, %v1026
      %v1035 = vadd.f32 %v984, %v1027
      %v1036 = vadd.f32 %v985, %v1028
      %v1037 = vadd.f32 %v986, %v1029
      %v1038 = vadd.f32 %v987, %v1030
      %v1039 = vadd.f32 %v988, %v1031
      %v1040 = vld [vmem:[%s1014 + $0x1] sm:$0xff]
      %v1041 = vld [vmem:[%s1014 + $0x11] sm:$0xff]
      %v1042 = vld [vmem:[%s1014 + $0x21] sm:$0xff]
      %v1043 = vld [vmem:[%s1014 + $0x31] sm:$0xff]
      %v1044 = vld [vmem:[%s1014 + $0x41] sm:$0xff]
      %v1045 = vld [vmem:[%s1014 + $0x51] sm:$0xff]
      %v1046 = vld [vmem:[%s1014 + $0x61] sm:$0xff]
      %v1047 = vld [vmem:[%s1014 + $0x71] sm:$0xff]
      %v1048 = vperm.slane %v308, 0
      %v1049 = vmul.f32 %v1040, %v1048
      %v1050 = vmul.f32 %v1041, %v1048
      %v1051 = vmul.f32 %v1042, %v1048
      %v1052 = vmul.f32 %v1043, %v1048
      %v1053 = vmul.f32 %v1044, %v1048
      %v1054 = vmul.f32 %v1045, %v1048
      %v1055 = vmul.f32 %v1046, %v1048
      %v1056 = vmul.f32 %v1047, %v1048
      %v1057 = vadd.f32 %v1006, %v1049
      %v1058 = vadd.f32 %v1007, %v1050
      %v1059 = vadd.f32 %v1008, %v1051
      %v1060 = vadd.f32 %v1009, %v1052
      %v1061 = vadd.f32 %v1010, %v1053
      %v1062 = vadd.f32 %v1011, %v1054
      %v1063 = vadd.f32 %v1012, %v1055
      %v1064 = vadd.f32 %v1013, %v1056
      %v1065 = vld [vmem:[%s1014 + $0x2] sm:$0xff]
      %v1066 = vld [vmem:[%s1014 + $0x12] sm:$0xff]
      %v1067 = vld [vmem:[%s1014 + $0x22] sm:$0xff]
      %v1068 = vld [vmem:[%s1014 + $0x32] sm:$0xff]
      %v1069 = vld [vmem:[%s1014 + $0x42] sm:$0xff]
      %v1070 = vld [vmem:[%s1014 + $0x52] sm:$0xff]
      %v1071 = vld [vmem:[%s1014 + $0x62] sm:$0xff]
      %v1072 = vld [vmem:[%s1014 + $0x72] sm:$0xff]
      %v1073 = vperm.slane %v309, 0
      %v1074 = vmul.f32 %v1065, %v1073
      %v1075 = vmul.f32 %v1066, %v1073
      %v1076 = vmul.f32 %v1067, %v1073
      %v1077 = vmul.f32 %v1068, %v1073
      %v1078 = vmul.f32 %v1069, %v1073
      %v1079 = vmul.f32 %v1070, %v1073
      %v1080 = vmul.f32 %v1071, %v1073
      %v1081 = vmul.f32 %v1072, %v1073
      %v1082 = vadd.f32 %v1032, %v1074
      %v1083 = vadd.f32 %v1033, %v1075
      %v1084 = vadd.f32 %v1034, %v1076
      %v1085 = vadd.f32 %v1035, %v1077
      %v1086 = vadd.f32 %v1036, %v1078
      %v1087 = vadd.f32 %v1037, %v1079
      %v1088 = vadd.f32 %v1038, %v1080
      %v1089 = vadd.f32 %v1039, %v1081
      %v1090 = vld [vmem:[%s1014 + $0x3] sm:$0xff]
      %v1091 = vld [vmem:[%s1014 + $0x13] sm:$0xff]
      %v1092 = vld [vmem:[%s1014 + $0x23] sm:$0xff]
      %v1093 = vld [vmem:[%s1014 + $0x33] sm:$0xff]
      %v1094 = vld [vmem:[%s1014 + $0x43] sm:$0xff]
      %v1095 = vld [vmem:[%s1014 + $0x53] sm:$0xff]
      %v1096 = vld [vmem:[%s1014 + $0x63] sm:$0xff]
      %v1097 = vld [vmem:[%s1014 + $0x73] sm:$0xff]
      %v1098 = vperm.slane %v310, 0
      %v1099 = vmul.f32 %v1090, %v1098
      %v1100 = vmul.f32 %v1091, %v1098
      %v1101 = vmul.f32 %v1092, %v1098
      %v1102 = vmul.f32 %v1093, %v1098
      %v1103 = vmul.f32 %v1094, %v1098
      %v1104 = vmul.f32 %v1095, %v1098
      %v1105 = vmul.f32 %v1096, %v1098
      %v1106 = vmul.f32 %v1097, %v1098
      %v1107 = vadd.f32 %v1057, %v1099
      %v1108 = vadd.f32 %v1058, %v1100
      %v1109 = vadd.f32 %v1059, %v1101
      %v1110 = vadd.f32 %v1060, %v1102
      %v1111 = vadd.f32 %v1061, %v1103
      %v1112 = vadd.f32 %v1062, %v1104
      %v1113 = vadd.f32 %v1063, %v1105
      %v1114 = vadd.f32 %v1064, %v1106
      %v1115 = vld [vmem:[%s1014 + $0x4] sm:$0xff]
      %v1116 = vld [vmem:[%s1014 + $0x14] sm:$0xff]
      %v1117 = vld [vmem:[%s1014 + $0x24] sm:$0xff]
      %v1118 = vld [vmem:[%s1014 + $0x34] sm:$0xff]
      %v1119 = vld [vmem:[%s1014 + $0x44] sm:$0xff]
      %v1120 = vld [vmem:[%s1014 + $0x54] sm:$0xff]
      %v1121 = vld [vmem:[%s1014 + $0x64] sm:$0xff]
      %v1122 = vld [vmem:[%s1014 + $0x74] sm:$0xff]
      %v1123 = vperm.slane %v311, 0
      %v1124 = vmul.f32 %v1115, %v1123
      %v1125 = vmul.f32 %v1116, %v1123
      %v1126 = vmul.f32 %v1117, %v1123
      %v1127 = vmul.f32 %v1118, %v1123
      %v1128 = vmul.f32 %v1119, %v1123
      %v1129 = vmul.f32 %v1120, %v1123
      %v1130 = vmul.f32 %v1121, %v1123
      %v1131 = vmul.f32 %v1122, %v1123
      %v1132 = vadd.f32 %v1082, %v1124
      %v1133 = vadd.f32 %v1083, %v1125
      %v1134 = vadd.f32 %v1084, %v1126
      %v1135 = vadd.f32 %v1085, %v1127
      %v1136 = vadd.f32 %v1086, %v1128
      %v1137 = vadd.f32 %v1087, %v1129
      %v1138 = vadd.f32 %v1088, %v1130
      %v1139 = vadd.f32 %v1089, %v1131
      %v1140 = vld [vmem:[%s1014 + $0x5] sm:$0xff]
      %v1141 = vld [vmem:[%s1014 + $0x15] sm:$0xff]
      %v1142 = vld [vmem:[%s1014 + $0x25] sm:$0xff]
      %v1143 = vld [vmem:[%s1014 + $0x35] sm:$0xff]
      %v1144 = vld [vmem:[%s1014 + $0x45] sm:$0xff]
      %v1145 = vld [vmem:[%s1014 + $0x55] sm:$0xff]
      %v1146 = vld [vmem:[%s1014 + $0x65] sm:$0xff]
      %v1147 = vld [vmem:[%s1014 + $0x75] sm:$0xff]
      %v1148 = vperm.slane %v312, 0
      %v1149 = vmul.f32 %v1140, %v1148
      %v1150 = vmul.f32 %v1141, %v1148
      %v1151 = vmul.f32 %v1142, %v1148
      %v1152 = vmul.f32 %v1143, %v1148
      %v1153 = vmul.f32 %v1144, %v1148
      %v1154 = vmul.f32 %v1145, %v1148
      %v1155 = vmul.f32 %v1146, %v1148
      %v1156 = vmul.f32 %v1147, %v1148
      %v1157 = vadd.f32 %v1107, %v1149
      %v1158 = vadd.f32 %v1108, %v1150
      %v1159 = vadd.f32 %v1109, %v1151
      %v1160 = vadd.f32 %v1110, %v1152
      %v1161 = vadd.f32 %v1111, %v1153
      %v1162 = vadd.f32 %v1112, %v1154
      %v1163 = vadd.f32 %v1113, %v1155
      %v1164 = vadd.f32 %v1114, %v1156
      %v1165 = vld [vmem:[%s1014 + $0x6] sm:$0xff]
      %v1166 = vld [vmem:[%s1014 + $0x16] sm:$0xff]
      %v1167 = vld [vmem:[%s1014 + $0x26] sm:$0xff]
      %v1168 = vld [vmem:[%s1014 + $0x36] sm:$0xff]
      %v1169 = vld [vmem:[%s1014 + $0x46] sm:$0xff]
      %v1170 = vld [vmem:[%s1014 + $0x56] sm:$0xff]
      %v1171 = vld [vmem:[%s1014 + $0x66] sm:$0xff]
      %v1172 = vld [vmem:[%s1014 + $0x76] sm:$0xff]
      %v1173 = vperm.slane %v313, 0
      %v1174 = vmul.f32 %v1165, %v1173
      %v1175 = vmul.f32 %v1166, %v1173
      %v1176 = vmul.f32 %v1167, %v1173
      %v1177 = vmul.f32 %v1168, %v1173
      %v1178 = vmul.f32 %v1169, %v1173
      %v1179 = vmul.f32 %v1170, %v1173
      %v1180 = vmul.f32 %v1171, %v1173
      %v1181 = vmul.f32 %v1172, %v1173
      %v1182 = vadd.f32 %v1132, %v1174
      %v1183 = vadd.f32 %v1133, %v1175
      %v1184 = vadd.f32 %v1134, %v1176
      %v1185 = vadd.f32 %v1135, %v1177
      %v1186 = vadd.f32 %v1136, %v1178
      %v1187 = vadd.f32 %v1137, %v1179
      %v1188 = vadd.f32 %v1138, %v1180
      %v1189 = vadd.f32 %v1139, %v1181
      %s1190 = scalar_lea.vmem [#allocation2], 80
      %v1191 = vld [vmem:[%s1190] sm:$0xff]
      %v1192 = vld [vmem:[%s1190 + $0x10] sm:$0xff]
      %v1193 = vld [vmem:[%s1190 + $0x20] sm:$0xff]
      %v1194 = vld [vmem:[%s1190 + $0x30] sm:$0xff]
      %v1195 = vld [vmem:[%s1190 + $0x40] sm:$0xff]
      %v1196 = vld [vmem:[%s1190 + $0x50] sm:$0xff]
      %v1197 = vld [vmem:[%s1190 + $0x60] sm:$0xff]
      %v1198 = vld [vmem:[%s1190 + $0x70] sm:$0xff]
      %v1199 = vperm.slane %v314, 0
      %v1200 = vmul.f32 %v1191, %v1199
      %v1201 = vmul.f32 %v1192, %v1199
      %v1202 = vmul.f32 %v1193, %v1199
      %v1203 = vmul.f32 %v1194, %v1199
      %v1204 = vmul.f32 %v1195, %v1199
      %v1205 = vmul.f32 %v1196, %v1199
      %v1206 = vmul.f32 %v1197, %v1199
      %v1207 = vmul.f32 %v1198, %v1199
      %v1208 = vadd.f32 %v1157, %v1200
      %v1209 = vadd.f32 %v1158, %v1201
      %v1210 = vadd.f32 %v1159, %v1202
      %v1211 = vadd.f32 %v1160, %v1203
      %v1212 = vadd.f32 %v1161, %v1204
      %v1213 = vadd.f32 %v1162, %v1205
      %v1214 = vadd.f32 %v1163, %v1206
      %v1215 = vadd.f32 %v1164, %v1207
      %v1216 = vld [vmem:[%s1190 + $0x1] sm:$0xff]
      %v1217 = vld [vmem:[%s1190 + $0x11] sm:$0xff]
      %v1218 = vld [vmem:[%s1190 + $0x21] sm:$0xff]
      %v1219 = vld [vmem:[%s1190 + $0x31] sm:$0xff]
      %v1220 = vld [vmem:[%s1190 + $0x41] sm:$0xff]
      %v1221 = vld [vmem:[%s1190 + $0x51] sm:$0xff]
      %v1222 = vld [vmem:[%s1190 + $0x61] sm:$0xff]
      %v1223 = vld [vmem:[%s1190 + $0x71] sm:$0xff]
      %v1224 = vperm.slane %v315, 0
      %v1225 = vmul.f32 %v1216, %v1224
      %v1226 = vmul.f32 %v1217, %v1224
      %v1227 = vmul.f32 %v1218, %v1224
      %v1228 = vmul.f32 %v1219, %v1224
      %v1229 = vmul.f32 %v1220, %v1224
      %v1230 = vmul.f32 %v1221, %v1224
      %v1231 = vmul.f32 %v1222, %v1224
      %v1232 = vmul.f32 %v1223, %v1224
      %v1233 = vadd.f32 %v1182, %v1225
      %v1234 = vadd.f32 %v1183, %v1226
      %v1235 = vadd.f32 %v1184, %v1227
      %v1236 = vadd.f32 %v1185, %v1228
      %v1237 = vadd.f32 %v1186, %v1229
      %v1238 = vadd.f32 %v1187, %v1230
      %v1239 = vadd.f32 %v1188, %v1231
      %v1240 = vadd.f32 %v1189, %v1232
      %v1241 = vld [vmem:[%s1190 + $0x2] sm:$0xff]
      %v1242 = vld [vmem:[%s1190 + $0x12] sm:$0xff]
      %v1243 = vld [vmem:[%s1190 + $0x22] sm:$0xff]
      %v1244 = vld [vmem:[%s1190 + $0x32] sm:$0xff]
      %v1245 = vld [vmem:[%s1190 + $0x42] sm:$0xff]
      %v1246 = vld [vmem:[%s1190 + $0x52] sm:$0xff]
      %v1247 = vld [vmem:[%s1190 + $0x62] sm:$0xff]
      %v1248 = vld [vmem:[%s1190 + $0x72] sm:$0xff]
      %v1249 = vperm.slane %v316, 0
      %v1250 = vmul.f32 %v1241, %v1249
      %v1251 = vmul.f32 %v1242, %v1249
      %v1252 = vmul.f32 %v1243, %v1249
      %v1253 = vmul.f32 %v1244, %v1249
      %v1254 = vmul.f32 %v1245, %v1249
      %v1255 = vmul.f32 %v1246, %v1249
      %v1256 = vmul.f32 %v1247, %v1249
      %v1257 = vmul.f32 %v1248, %v1249
      %v1258 = vadd.f32 %v1208, %v1250
      %v1259 = vadd.f32 %v1209, %v1251
      %v1260 = vadd.f32 %v1210, %v1252
      %v1261 = vadd.f32 %v1211, %v1253
      %v1262 = vadd.f32 %v1212, %v1254
      %v1263 = vadd.f32 %v1213, %v1255
      %v1264 = vadd.f32 %v1214, %v1256
      %v1265 = vadd.f32 %v1215, %v1257
      %v1266 = vld [vmem:[%s1190 + $0x3] sm:$0xff]
      %v1267 = vld [vmem:[%s1190 + $0x13] sm:$0xff]
      %v1268 = vld [vmem:[%s1190 + $0x23] sm:$0xff]
      %v1269 = vld [vmem:[%s1190 + $0x33] sm:$0xff]
      %v1270 = vld [vmem:[%s1190 + $0x43] sm:$0xff]
      %v1271 = vld [vmem:[%s1190 + $0x53] sm:$0xff]
      %v1272 = vld [vmem:[%s1190 + $0x63] sm:$0xff]
      %v1273 = vld [vmem:[%s1190 + $0x73] sm:$0xff]
      %v1274 = vperm.slane %v317, 0
      %v1275 = vmul.f32 %v1266, %v1274
      %v1276 = vmul.f32 %v1267, %v1274
      %v1277 = vmul.f32 %v1268, %v1274
      %v1278 = vmul.f32 %v1269, %v1274
      %v1279 = vmul.f32 %v1270, %v1274
      %v1280 = vmul.f32 %v1271, %v1274
      %v1281 = vmul.f32 %v1272, %v1274
      %v1282 = vmul.f32 %v1273, %v1274
      %v1283 = vadd.f32 %v1233, %v1275
      %v1284 = vadd.f32 %v1234, %v1276
      %v1285 = vadd.f32 %v1235, %v1277
      %v1286 = vadd.f32 %v1236, %v1278
      %v1287 = vadd.f32 %v1237, %v1279
      %v1288 = vadd.f32 %v1238, %v1280
      %v1289 = vadd.f32 %v1239, %v1281
      %v1290 = vadd.f32 %v1240, %v1282
      %v1291 = vld [vmem:[%s1190 + $0x4] sm:$0xff]
      %v1292 = vld [vmem:[%s1190 + $0x14] sm:$0xff]
      %v1293 = vld [vmem:[%s1190 + $0x24] sm:$0xff]
      %v1294 = vld [vmem:[%s1190 + $0x34] sm:$0xff]
      %v1295 = vld [vmem:[%s1190 + $0x44] sm:$0xff]
      %v1296 = vld [vmem:[%s1190 + $0x54] sm:$0xff]
      %v1297 = vld [vmem:[%s1190 + $0x64] sm:$0xff]
      %v1298 = vld [vmem:[%s1190 + $0x74] sm:$0xff]
      %v1299 = vperm.slane %v318, 0
      %v1300 = vmul.f32 %v1291, %v1299
      %v1301 = vmul.f32 %v1292, %v1299
      %v1302 = vmul.f32 %v1293, %v1299
      %v1303 = vmul.f32 %v1294, %v1299
      %v1304 = vmul.f32 %v1295, %v1299
      %v1305 = vmul.f32 %v1296, %v1299
      %v1306 = vmul.f32 %v1297, %v1299
      %v1307 = vmul.f32 %v1298, %v1299
      %v1308 = vadd.f32 %v1258, %v1300
      %v1309 = vadd.f32 %v1259, %v1301
      %v1310 = vadd.f32 %v1260, %v1302
      %v1311 = vadd.f32 %v1261, %v1303
      %v1312 = vadd.f32 %v1262, %v1304
      %v1313 = vadd.f32 %v1263, %v1305
      %v1314 = vadd.f32 %v1264, %v1306
      %v1315 = vadd.f32 %v1265, %v1307
      %v1316 = vld [vmem:[%s1190 + $0x5] sm:$0xff]
      %v1317 = vld [vmem:[%s1190 + $0x15] sm:$0xff]
      %v1318 = vld [vmem:[%s1190 + $0x25] sm:$0xff]
      %v1319 = vld [vmem:[%s1190 + $0x35] sm:$0xff]
      %v1320 = vld [vmem:[%s1190 + $0x45] sm:$0xff]
      %v1321 = vld [vmem:[%s1190 + $0x55] sm:$0xff]
      %v1322 = vld [vmem:[%s1190 + $0x65] sm:$0xff]
      %v1323 = vld [vmem:[%s1190 + $0x75] sm:$0xff]
      %v1324 = vperm.slane %v319, 0
      %v1325 = vmul.f32 %v1316, %v1324
      %v1326 = vmul.f32 %v1317, %v1324
      %v1327 = vmul.f32 %v1318, %v1324
      %v1328 = vmul.f32 %v1319, %v1324
      %v1329 = vmul.f32 %v1320, %v1324
      %v1330 = vmul.f32 %v1321, %v1324
      %v1331 = vmul.f32 %v1322, %v1324
      %v1332 = vmul.f32 %v1323, %v1324
      %v1333 = vadd.f32 %v1283, %v1325
      %v1334 = vadd.f32 %v1284, %v1326
      %v1335 = vadd.f32 %v1285, %v1327
      %v1336 = vadd.f32 %v1286, %v1328
      %v1337 = vadd.f32 %v1287, %v1329
      %v1338 = vadd.f32 %v1288, %v1330
      %v1339 = vadd.f32 %v1289, %v1331
      %v1340 = vadd.f32 %v1290, %v1332
      %v1341 = vld [vmem:[%s1190 + $0x6] sm:$0xff]
      %v1342 = vld [vmem:[%s1190 + $0x16] sm:$0xff]
      %v1343 = vld [vmem:[%s1190 + $0x26] sm:$0xff]
      %v1344 = vld [vmem:[%s1190 + $0x36] sm:$0xff]
      %v1345 = vld [vmem:[%s1190 + $0x46] sm:$0xff]
      %v1346 = vld [vmem:[%s1190 + $0x56] sm:$0xff]
      %v1347 = vld [vmem:[%s1190 + $0x66] sm:$0xff]
      %v1348 = vld [vmem:[%s1190 + $0x76] sm:$0xff]
      %v1349 = vperm.slane %v320, 0
      %v1350 = vmul.f32 %v1341, %v1349
      %v1351 = vmul.f32 %v1342, %v1349
      %v1352 = vmul.f32 %v1343, %v1349
      %v1353 = vmul.f32 %v1344, %v1349
      %v1354 = vmul.f32 %v1345, %v1349
      %v1355 = vmul.f32 %v1346, %v1349
      %v1356 = vmul.f32 %v1347, %v1349
      %v1357 = vmul.f32 %v1348, %v1349
      %v1358 = vadd.f32 %v1308, %v1350
      %v1359 = vadd.f32 %v1309, %v1351
      %v1360 = vadd.f32 %v1310, %v1352
      %v1361 = vadd.f32 %v1311, %v1353
      %v1362 = vadd.f32 %v1312, %v1354
      %v1363 = vadd.f32 %v1313, %v1355
      %v1364 = vadd.f32 %v1314, %v1356
      %v1365 = vadd.f32 %v1315, %v1357
      %s1366 = scalar_lea.vmem [#allocation2], 96
      %v1367 = vld [vmem:[%s1366] sm:$0xff]
      %v1368 = vld [vmem:[%s1366 + $0x10] sm:$0xff]
      %v1369 = vld [vmem:[%s1366 + $0x20] sm:$0xff]
      %v1370 = vld [vmem:[%s1366 + $0x30] sm:$0xff]
      %v1371 = vld [vmem:[%s1366 + $0x40] sm:$0xff]
      %v1372 = vld [vmem:[%s1366 + $0x50] sm:$0xff]
      %v1373 = vld [vmem:[%s1366 + $0x60] sm:$0xff]
      %v1374 = vld [vmem:[%s1366 + $0x70] sm:$0xff]
      %v1375 = vperm.slane %v321, 0
      %v1376 = vmul.f32 %v1367, %v1375
      %v1377 = vmul.f32 %v1368, %v1375
      %v1378 = vmul.f32 %v1369, %v1375
      %v1379 = vmul.f32 %v1370, %v1375
      %v1380 = vmul.f32 %v1371, %v1375
      %v1381 = vmul.f32 %v1372, %v1375
      %v1382 = vmul.f32 %v1373, %v1375
      %v1383 = vmul.f32 %v1374, %v1375
      %v1384 = vadd.f32 %v1333, %v1376
      %v1385 = vadd.f32 %v1334, %v1377
      %v1386 = vadd.f32 %v1335, %v1378
      %v1387 = vadd.f32 %v1336, %v1379
      %v1388 = vadd.f32 %v1337, %v1380
      %v1389 = vadd.f32 %v1338, %v1381
      %v1390 = vadd.f32 %v1339, %v1382
      %v1391 = vadd.f32 %v1340, %v1383
      %v1392 = vld [vmem:[%s1366 + $0x1] sm:$0xff]
      %v1393 = vld [vmem:[%s1366 + $0x11] sm:$0xff]
      %v1394 = vld [vmem:[%s1366 + $0x21] sm:$0xff]
      %v1395 = vld [vmem:[%s1366 + $0x31] sm:$0xff]
      %v1396 = vld [vmem:[%s1366 + $0x41] sm:$0xff]
      %v1397 = vld [vmem:[%s1366 + $0x51] sm:$0xff]
      %v1398 = vld [vmem:[%s1366 + $0x61] sm:$0xff]
      %v1399 = vld [vmem:[%s1366 + $0x71] sm:$0xff]
      %v1400 = vperm.slane %v322, 0
      %v1401 = vmul.f32 %v1392, %v1400
      %v1402 = vmul.f32 %v1393, %v1400
      %v1403 = vmul.f32 %v1394, %v1400
      %v1404 = vmul.f32 %v1395, %v1400
      %v1405 = vmul.f32 %v1396, %v1400
      %v1406 = vmul.f32 %v1397, %v1400
      %v1407 = vmul.f32 %v1398, %v1400
      %v1408 = vmul.f32 %v1399, %v1400
      %v1409 = vadd.f32 %v1358, %v1401
      %v1410 = vadd.f32 %v1359, %v1402
      %v1411 = vadd.f32 %v1360, %v1403
      %v1412 = vadd.f32 %v1361, %v1404
      %v1413 = vadd.f32 %v1362, %v1405
      %v1414 = vadd.f32 %v1363, %v1406
      %v1415 = vadd.f32 %v1364, %v1407
      %v1416 = vadd.f32 %v1365, %v1408
      %v1417 = vld [vmem:[%s1366 + $0x2] sm:$0xff]
      %v1418 = vld [vmem:[%s1366 + $0x12] sm:$0xff]
      %v1419 = vld [vmem:[%s1366 + $0x22] sm:$0xff]
      %v1420 = vld [vmem:[%s1366 + $0x32] sm:$0xff]
      %v1421 = vld [vmem:[%s1366 + $0x42] sm:$0xff]
      %v1422 = vld [vmem:[%s1366 + $0x52] sm:$0xff]
      %v1423 = vld [vmem:[%s1366 + $0x62] sm:$0xff]
      %v1424 = vld [vmem:[%s1366 + $0x72] sm:$0xff]
      %v1425 = vperm.slane %v323, 0
      %v1426 = vmul.f32 %v1417, %v1425
      %v1427 = vmul.f32 %v1418, %v1425
      %v1428 = vmul.f32 %v1419, %v1425
      %v1429 = vmul.f32 %v1420, %v1425
      %v1430 = vmul.f32 %v1421, %v1425
      %v1431 = vmul.f32 %v1422, %v1425
      %v1432 = vmul.f32 %v1423, %v1425
      %v1433 = vmul.f32 %v1424, %v1425
      %v1434 = vadd.f32 %v1384, %v1426
      %v1435 = vadd.f32 %v1385, %v1427
      %v1436 = vadd.f32 %v1386, %v1428
      %v1437 = vadd.f32 %v1387, %v1429
      %v1438 = vadd.f32 %v1388, %v1430
      %v1439 = vadd.f32 %v1389, %v1431
      %v1440 = vadd.f32 %v1390, %v1432
      %v1441 = vadd.f32 %v1391, %v1433
      %v1442 = vld [vmem:[%s1366 + $0x3] sm:$0xff]
      %v1443 = vld [vmem:[%s1366 + $0x13] sm:$0xff]
      %v1444 = vld [vmem:[%s1366 + $0x23] sm:$0xff]
      %v1445 = vld [vmem:[%s1366 + $0x33] sm:$0xff]
      %v1446 = vld [vmem:[%s1366 + $0x43] sm:$0xff]
      %v1447 = vld [vmem:[%s1366 + $0x53] sm:$0xff]
      %v1448 = vld [vmem:[%s1366 + $0x63] sm:$0xff]
      %v1449 = vld [vmem:[%s1366 + $0x73] sm:$0xff]
      %v1450 = vperm.slane %v324, 0
      %v1451 = vmul.f32 %v1442, %v1450
      %v1452 = vmul.f32 %v1443, %v1450
      %v1453 = vmul.f32 %v1444, %v1450
      %v1454 = vmul.f32 %v1445, %v1450
      %v1455 = vmul.f32 %v1446, %v1450
      %v1456 = vmul.f32 %v1447, %v1450
      %v1457 = vmul.f32 %v1448, %v1450
      %v1458 = vmul.f32 %v1449, %v1450
      %v1459 = vadd.f32 %v1409, %v1451
      %v1460 = vadd.f32 %v1410, %v1452
      %v1461 = vadd.f32 %v1411, %v1453
      %v1462 = vadd.f32 %v1412, %v1454
      %v1463 = vadd.f32 %v1413, %v1455
      %v1464 = vadd.f32 %v1414, %v1456
      %v1465 = vadd.f32 %v1415, %v1457
      %v1466 = vadd.f32 %v1416, %v1458
      %v1467 = vld [vmem:[%s1366 + $0x4] sm:$0xff]
      %v1468 = vld [vmem:[%s1366 + $0x14] sm:$0xff]
      %v1469 = vld [vmem:[%s1366 + $0x24] sm:$0xff]
      %v1470 = vld [vmem:[%s1366 + $0x34] sm:$0xff]
      %v1471 = vld [vmem:[%s1366 + $0x44] sm:$0xff]
      %v1472 = vld [vmem:[%s1366 + $0x54] sm:$0xff]
      %v1473 = vld [vmem:[%s1366 + $0x64] sm:$0xff]
      %v1474 = vld [vmem:[%s1366 + $0x74] sm:$0xff]
      %v1475 = vperm.slane %v325, 0
      %v1476 = vmul.f32 %v1467, %v1475
      %v1477 = vmul.f32 %v1468, %v1475
      %v1478 = vmul.f32 %v1469, %v1475
      %v1479 = vmul.f32 %v1470, %v1475
      %v1480 = vmul.f32 %v1471, %v1475
      %v1481 = vmul.f32 %v1472, %v1475
      %v1482 = vmul.f32 %v1473, %v1475
      %v1483 = vmul.f32 %v1474, %v1475
      %v1484 = vadd.f32 %v1434, %v1476
      %v1485 = vadd.f32 %v1435, %v1477
      %v1486 = vadd.f32 %v1436, %v1478
      %v1487 = vadd.f32 %v1437, %v1479
      %v1488 = vadd.f32 %v1438, %v1480
      %v1489 = vadd.f32 %v1439, %v1481
      %v1490 = vadd.f32 %v1440, %v1482
      %v1491 = vadd.f32 %v1441, %v1483
      %v1492 = vld [vmem:[%s1366 + $0x5] sm:$0xff]
      %v1493 = vld [vmem:[%s1366 + $0x15] sm:$0xff]
      %v1494 = vld [vmem:[%s1366 + $0x25] sm:$0xff]
      %v1495 = vld [vmem:[%s1366 + $0x35] sm:$0xff]
      %v1496 = vld [vmem:[%s1366 + $0x45] sm:$0xff]
      %v1497 = vld [vmem:[%s1366 + $0x55] sm:$0xff]
      %v1498 = vld [vmem:[%s1366 + $0x65] sm:$0xff]
      %v1499 = vld [vmem:[%s1366 + $0x75] sm:$0xff]
      %v1500 = vperm.slane %v326, 0
      %v1501 = vmul.f32 %v1492, %v1500
      %v1502 = vmul.f32 %v1493, %v1500
      %v1503 = vmul.f32 %v1494, %v1500
      %v1504 = vmul.f32 %v1495, %v1500
      %v1505 = vmul.f32 %v1496, %v1500
      %v1506 = vmul.f32 %v1497, %v1500
      %v1507 = vmul.f32 %v1498, %v1500
      %v1508 = vmul.f32 %v1499, %v1500
      %v1509 = vadd.f32 %v1459, %v1501
      %v1510 = vadd.f32 %v1460, %v1502
      %v1511 = vadd.f32 %v1461, %v1503
      %v1512 = vadd.f32 %v1462, %v1504
      %v1513 = vadd.f32 %v1463, %v1505
      %v1514 = vadd.f32 %v1464, %v1506
      %v1515 = vadd.f32 %v1465, %v1507
      %v1516 = vadd.f32 %v1466, %v1508
      %v1517 = vld [vmem:[%s1366 + $0x6] sm:$0xff]
      %v1518 = vld [vmem:[%s1366 + $0x16] sm:$0xff]
      %v1519 = vld [vmem:[%s1366 + $0x26] sm:$0xff]
      %v1520 = vld [vmem:[%s1366 + $0x36] sm:$0xff]
      %v1521 = vld [vmem:[%s1366 + $0x46] sm:$0xff]
      %v1522 = vld [vmem:[%s1366 + $0x56] sm:$0xff]
      %v1523 = vld [vmem:[%s1366 + $0x66] sm:$0xff]
      %v1524 = vld [vmem:[%s1366 + $0x76] sm:$0xff]
      %v1525 = vperm.slane %v327, 0
      %v1526 = vmul.f32 %v1517, %v1525
      %v1527 = vmul.f32 %v1518, %v1525
      %v1528 = vmul.f32 %v1519, %v1525
      %v1529 = vmul.f32 %v1520, %v1525
      %v1530 = vmul.f32 %v1521, %v1525
      %v1531 = vmul.f32 %v1522, %v1525
      %v1532 = vmul.f32 %v1523, %v1525
      %v1533 = vmul.f32 %v1524, %v1525
      %v1534 = vadd.f32 %v1484, %v1526
      %v1535 = vadd.f32 %v1485, %v1527
      %v1536 = vadd.f32 %v1486, %v1528
      %v1537 = vadd.f32 %v1487, %v1529
      %v1538 = vadd.f32 %v1488, %v1530
      %v1539 = vadd.f32 %v1489, %v1531
      %v1540 = vadd.f32 %v1490, %v1532
      %v1541 = vadd.f32 %v1491, %v1533
      %v1542 = vadd.f32 %v1534, %v1509
      %v1543 = vadd.f32 %v1535, %v1510
      %v1544 = vadd.f32 %v1536, %v1511
      %v1545 = vadd.f32 %v1537, %v1512
      %v1546 = vadd.f32 %v1538, %v1513
      %v1547 = vadd.f32 %v1539, %v1514
      %v1548 = vadd.f32 %v1540, %v1515
      %v1549 = vadd.f32 %v1541, %v1516
      %v1550 = vld [vmem:[%s224] sm:$0x1]
      %v1552 = vperm.slane %v1550, 0
      %v1554 = vadd.f32 %v1542, %v1552
      %v1555 = vadd.f32 %v1543, %v1552
      %v1556 = vadd.f32 %v1544, %v1552
      %v1557 = vadd.f32 %v1545, %v1552
      %v1558 = vadd.f32 %v1546, %v1552
      %v1559 = vadd.f32 %v1547, %v1552
      %v1560 = vadd.f32 %v1548, %v1552
      %v1561 = vadd.f32 %v1549, %v1552
      %1562 = vst [vmem:[%s232] sm:$0xff] %v1554
      %1563 = vst [vmem:[%s232 + $0x8] sm:$0xff] %v1555
      %1564 = vst [vmem:[%s232 + $0x10] sm:$0xff] %v1556
      %1565 = vst [vmem:[%s232 + $0x18] sm:$0xff] %v1557
      %1566 = vst [vmem:[%s232 + $0x20] sm:$0xff] %v1558
      %1567 = vst [vmem:[%s232 + $0x28] sm:$0xff] %v1559
      %1568 = vst [vmem:[%s232 + $0x30] sm:$0xff] %v1560
      %1569 = vst [vmem:[%s232 + $0x38] sm:$0xff] %v1561
      %p1570 = scmp.lt.s32.totalorder %s18, 1
      %s1571 = scalar_select %p1570, %s18, 1
      %p1572 = scmp.lt.s32.totalorder %s19, 0
      %s1573 = scalar_select %p1572, %s19, 0
      %s1574 = smul.addr %s1571, 8
      %s1575 = sadd.s32 %s1573, %s1574
      %s1576 = smul.addr %s1575, 8
      %s1577 = scalar_lea.vmem %s3, %s1576
      // Predicated region
      $region33: #{ppeg_forward.1} parent=31 // pred_check
        %p1578 = pneg %p126
      $region34: #{ppeg_forward.1} parent=31 // pred_check_branch
        %1580 = sbr.rel (%p1578) target = $region36
      $region35: #{ppeg_forward.1} parent=31 // pred_region
        _
      $region36: #{ppeg_forward.1} parent=31 // pred_fallthru
        _
    $region32: #{ppeg_forward.1} parent=5 // pred_fallthru
      _
    %p1581 = scmp.le.s32.totalorder 2, %s9
    // Predicated region
    $region37: #{ppeg_forward.1} parent=5 // pred_check
      %p1582 = pneg %p1581
    $region38: #{ppeg_forward.1} parent=5 // pred_check_branch
      %1584 = sbr.rel (%p1582) target = $region40
    $region39: #{ppeg_forward.1} parent=5 // pred_region
      %s1585 = ssub.s32 %s9, 2
      // Predicated region
      $region41: #{ppeg_forward.1} parent=39 // pred_check
        %p1586 = pneg %p132
      $region42: #{ppeg_forward.1} parent=39 // pred_check_branch
        %1588 = sbr.rel (%p1586) target = $region44
      $region43: #{ppeg_forward.1} parent=39 // pred_region
        %p1589 = scmp.lt.s32.totalorder %s20, 1
        %s1590 = scalar_select %p1589, %s20, 1
        %p1591 = scmp.lt.s32.totalorder %s21, 0
        %s1592 = scalar_select %p1591, %s21, 0
        %s1593 = smul.addr %s1590, 8
        %s1594 = sadd.s32 %s1592, %s1593
        %s1595 = smul.addr %s1594, 8
        %s1596 = scalar_lea.vmem %s3, %s1595
      $region44: #{ppeg_forward.1} parent=39 // pred_fallthru
        _
    $region40: #{ppeg_forward.1} parent=5 // pred_fallthru
      _
  $region6: #{ppeg_forward.1} parent=0 // loop_footer
    %s13 = sadd.s32 1, %s9
  $region7: #{ppeg_forward.1} parent=0 // loop_footer_branch
    %8 = sbr.rel target = $region3
  $region8: #{ppeg_forward.1} parent=0 // loop_exit
    _

</llo_original>
